<compile_context>
chip_gen: v7x
topology: tpu7x:2x2x1
jax: 0.10.0
libtpu: 0.0.40
codegen_flags: <defaults>
</compile_context>

<pallas_src>
import math

import jax
import jax.numpy as jnp
from jax.experimental import pallas as pl
from jax.experimental.pallas import tpu as pltpu


def _round_up(x, m):
    return (x + m - 1) // m * m


# --------------------------------------------------------------------------------------
# In-kernel math helpers (f32)
# --------------------------------------------------------------------------------------
def _mish(x):
    # torch mish: x * tanh(softplus(x)), softplus threshold 20.
    # tanh(log1p(e^x)) == (e^2x + 2 e^x) / (e^2x + 2 e^x + 2)  ->  1 exp + 1 approx recip.
    xc = jnp.minimum(x, 20.0)
    e = jnp.exp(xc)
    n = e * (e + 2.0)
    y = x * n * pl.reciprocal(n + 2.0, approx=True)
    return jnp.where(x > 20.0, x, y)


def _sigmoid(x):
    e = jnp.exp(-jnp.abs(x))
    r = pl.reciprocal(1.0 + e, approx=True)
    return jnp.where(x >= 0.0, r, e * r)


def _pairwise_sum(parts):
    # two independent accumulation chains so K VPU adds / XLU rolls can overlap
    acc0 = parts[0]
    if len(parts) == 1:
        return acc0
    acc1 = parts[1]
    for k in range(2, len(parts)):
        if k % 2 == 0:
            acc0 = acc0 + parts[k]
        else:
            acc1 = acc1 + parts[k]
    return acc0 + acc1


# --------------------------------------------------------------------------------------
# One-time capability probes (run eagerly, outside any trace)
# --------------------------------------------------------------------------------------
_ROLL_MODE = None  # "numpy" | "reversed" | "slices"


def _probe_roll_mode():
    global _ROLL_MODE
    if _ROLL_MODE is None:
        try:
            def k(x_ref, o_ref):
                o_ref[...] = pltpu.roll(x_ref[...], shift=1, axis=1)

            x = jax.lax.broadcasted_iota(jnp.int32, (8, 128), 1)
            y = pl.pallas_call(
                k, out_shape=jax.ShapeDtypeStruct((8, 128), jnp.int32))(x)
            # jnp.roll convention: out[:, 1] == in[:, 0] == 0
            _ROLL_MODE = "numpy" if int(y[0, 1]) == 0 else "reversed"
        except Exception:
            # roll unavailable -> fall back to (slower) lane-shifted slices
            _ROLL_MODE = "slices"
    return _ROLL_MODE


_BUF1 = None  # whether pipeline_mode=pl.Buffered(1) is usable for constant param specs


def _probe_buffered_one():
    global _BUF1
    if _BUF1 is None:
        try:
            def k(x_ref, w_ref, o_ref):
                o_ref[...] = x_ref[...] + w_ref[...]

            x = jnp.zeros((2, 8, 128), jnp.float32)
            w = jnp.ones((8, 128), jnp.float32)
            y = pl.pallas_call(
                k, grid=(2,),
                in_specs=[pl.BlockSpec((1, 8, 128), lambda n: (n, 0, 0)),
                          pl.BlockSpec((8, 128), lambda n: (0, 0),
                                       pipeline_mode=pl.Buffered(1))],
                out_specs=pl.BlockSpec((1, 8, 128), lambda n: (n, 0, 0)),
                out_shape=jax.ShapeDtypeStruct((2, 8, 128), jnp.float32),
            )(x, w)
            # value check on the *second* grid step (buffer revisit path)
            _BUF1 = bool(abs(float(y[1, 0, 0]) - 1.0) < 1e-6)
        except Exception:
            _BUF1 = False
    return _BUF1


def _vmem_limit_bytes():
    # per-generation VMEM limit: ~0.8 * physical, headroom for compiler scratch.
    # (~102 MiB on 128 MiB v5e/v6e, ~51 MiB on 64 MiB v7x)
    try:
        cap = int(pltpu.get_tpu_info().vmem_capacity_bytes)
        return max(32 << 20, min(int(cap * 0.8), cap - (12 << 20)))
    except Exception:
        return 48 << 20


# --------------------------------------------------------------------------------------
# Per-layer bodies (run inside the fused kernel; operate on f32 values + refs)
# --------------------------------------------------------------------------------------
def _dense_block(h, prm, cfg):
    """Dense Conv1d (bias=False, BN scale pre-folded into weight) + shift + Mish
       (+ optional rezero residual)."""
    K, pad, C_in, L_out = cfg["K"], cfg["pad"], cfg["C_in"], cfg["L_out"]
    w_ref, sh_ref = prm[0], prm[1]

    if pad > 0:
        z = jnp.zeros((C_in, pad), jnp.float32)
        xp = jnp.concatenate([z, h, z], axis=1)      # stem has C_in == 1: negligible
    else:
        xp = h

    if C_in == 1:
        # single input channel: VPU broadcast multiply-accumulate, skip the MXU
        w = w_ref[...]                               # (C_out, K) f32, BN scale folded
        parts = [w[:, k:k + 1] * xp[:, k:k + L_out] for k in range(K)]
    else:
        # K accumulated MXU dots (no im2col concatenate slab)
        w = w_ref[...]                               # (C_out, K*C_in) bf16, BN folded
        parts = [jnp.dot(w[:, k * C_in:(k + 1) * C_in],
                         xp[:, k:k + L_out].astype(jnp.bfloat16),
                         preferred_element_type=jnp.float32)
                 for k in range(K)]

    y = _mish(_pairwise_sum(parts) + sh_ref[...])
    if cfg["residual"]:
        y = h + prm[2][0, 0] * y
    return y


def _sep_block(h, prm, hp_ref, cfg, roll_mode):
    """[expansion 1x1] -> depthwise conv -> BN -> Mish -> [SE] -> pointwise 1x1 -> BN
       -> Mish (-> dropout = identity) -> [rezero residual].  BN scales pre-folded."""
    C, K, pad = cfg["C"], cfg["K"], cfg["pad"]
    L_out, Lpad = cfg["L_out"], cfg["Lpad"]
    cols = cfg["cols"]
    orig = h

    i = 0
    we = None
    if cfg["expansion"]:
        we = prm[i]; i += 1
    wd = prm[i]; i += 1
    if cfg["sqex"]:
        w1t, b1, w2 = prm[i], prm[i + 1], prm[i + 2]; i += 3
    wp = prm[i]; i += 1
    vec = prm[i][...]; i += 1                        # packed (C, ncols) per-channel slab

    def col(name):
        j = cols[name]
        return vec[:, j:j + 1]

    # ---- optional 1x1 expansion ----
    if cfg["expansion"]:
        h = jnp.dot(we[...], h.astype(jnp.bfloat16),
                    preferred_element_type=jnp.float32)
        h = _mish(h + col("esh"))

    # ---- depthwise conv on the shared lane-aligned VMEM scratch ----
    L = h.shape[1]
    wdf = wd[...]                                    # (C, K) f32 (BN scale folded), VPU
    if roll_mode == "slices":
        # fallback: pad-offset store + lane-shifted value slices
        if pad > 0:
            hp_ref[0:C, 0:pad] = jnp.zeros((C, pad), jnp.float32)
        hp_ref[0:C, pad:pad + L] = h
        if Lpad - (pad + L) > 0:
            hp_ref[0:C, pad + L:Lpad] = jnp.zeros((C, Lpad - pad - L), jnp.float32)
        hp = hp_ref[0:C, 0:Lpad]
        parts = [wdf[:, k:k + 1] * hp[:, k:k + L_out] for k in range(K)]
        acc = _pairwise_sum(parts)
    else:
        # lane-offset-0 store (plain unmasked vst); conv padding folded into circular
        # roll shifts.  Zero tail [L, Lpad) >= 2*pad absorbs both wrap directions.
        hp_ref[0:C, 0:L] = h
        if Lpad > L:
            hp_ref[0:C, L:Lpad] = jnp.zeros((C, Lpad - L), jnp.float32)
        hp = hp_ref[0:C, 0:Lpad]
        parts = []
        for k in range(K):
            d = k - pad                              # want out[j] = hp[(j + d) mod Lpad]
            if d == 0:
                t = hp
            else:
                s = (-d) % Lpad if roll_mode == "numpy" else d % Lpad
                t = pltpu.roll(hp, shift=s, axis=1)
            parts.append(wdf[:, k:k + 1] * t)
        acc = _pairwise_sum(parts)[:, :L_out]        # offset-0 slice: lane aligned
    h = _mish(acc + col("dsh"))

    # ---- squeeze & excite on VPU/XLU (no width-1 MXU dots) ----
    if cfg["sqex"]:
        avg = jnp.mean(h, axis=1, keepdims=True)                                # (C,1)
        z = _mish(jnp.sum(w1t[...] * avg, axis=0, keepdims=True) + b1[...])     # (1,R)
        g = _sigmoid(jnp.sum(w2[...] * z, axis=1, keepdims=True) + col("b2"))   # (C,1)
        h = h * g

    # ---- pointwise 1x1 + BN shift + Mish (dropout = identity at inference) ----
    h = jnp.dot(wp[...], h.astype(jnp.bfloat16),
                preferred_element_type=jnp.float32)
    h = _mish(h + col("psh"))

    if cfg["residual"]:
        h = orig + prm[i][0, 0] * h                  # rezero scalar from SMEM
    return h


# --------------------------------------------------------------------------------------
# Fused whole-network kernel
# --------------------------------------------------------------------------------------
def _make_fused_kernel(layer_cfgs, n_in, roll_mode, has_scratch):
    def kernel(*refs):
        in_refs = refs[:n_in]
        o_ref = refs[n_in]
        hp_ref = refs[n_in + 1] if has_scratch else None
        pos = [1]                                    # in_refs[0] is x

        def take(k):
            p = in_refs[pos[0]:pos[0] + k]
            pos[0] += k
            return p

        h = in_refs[0][0].astype(jnp.float32)        # (C_in0, L0)
        for cfg in layer_cfgs:
            prm = take(cfg["n_refs"])
            if cfg["type"] == "dense":
                h = _dense_block(h, prm, cfg)
            else:
                h = _sep_block(h, prm, hp_ref, cfg, roll_mode)

        # head: channel-major logits (Vp, L) -- vocab padded to 8 sublanes; padded rows
        # carry bias -1e9 so exp() contributes ~0 to the log-softmax denominator.
        wf, bf = take(2)
        logits = jnp.dot(wf[...], h.astype(jnp.bfloat16),
                         preferred_element_type=jnp.float32) + bf[...]
        m = jnp.max(logits, axis=0, keepdims=True)
        s = logits - m
        lse = jnp.log(jnp.sum(jnp.exp(s), axis=0, keepdims=True))
        o_ref[0] = (s - lse).astype(o_ref.dtype)

    return kernel


# --------------------------------------------------------------------------------------
# Parameter construction (deterministic, synthetic) and forward wrapper
# --------------------------------------------------------------------------------------
class KeyGen:
    def __init__(self, seed):
        self._key = jax.random.PRNGKey(seed)

    def __call__(self):
        self._key, sub = jax.random.split(self._key)
        return sub


def make_bn(C, kg, eps=1e-5):
    gamma = 1.0 + 0.1 * jax.random.normal(kg(), (C,), jnp.float32)
    beta = 0.05 * jax.random.normal(kg(), (C,), jnp.float32)
    mean = 0.02 * jax.random.normal(kg(), (C,), jnp.float32)
    var = 1.0 + 0.1 * jnp.abs(jax.random.normal(kg(), (C,), jnp.float32))
    scale = gamma / jnp.sqrt(var + eps)
    shift = beta - mean * scale
    return scale.reshape(C, 1), shift.reshape(C, 1)


def winit(kg, shape, fan_in):
    return jax.random.normal(kg(), shape, jnp.float32) / math.sqrt(max(fan_in, 1))


def build_network(arch, seqlen, vocab_size, sqex_reduction, kg):
    roll_mode = _probe_roll_mode()
    buffered1 = _probe_buffered_one()

    layer_cfgs, flat, descs = [], [], []
    sep_dims = []

    def add(a, smem=False):
        flat.append(a)
        descs.append(dict(shape=tuple(a.shape), smem=smem))

    in_channels = 1
    L = seqlen
    for i, (paddingarg, out_channels, seperable, kernel, stride, sqex, _dodrop) in enumerate(arch):
        assert stride == 1, "TODO(synk): depthwise stride > 1 (rna_default layer 2) not implemented"
        pad = kernel // 2 if paddingarg == -1 else paddingarg
        L_out = (L + 2 * pad - (kernel - stride)) // stride
        residual = (in_channels == out_channels) and (L_out == L)

        if not seperable:
            scale, shift = make_bn(out_channels, kg)
            w3 = winit(kg, (out_channels, in_channels, kernel), in_channels * kernel)
            # (C_out, C_in, K) -> (C_out, K*C_in); fold BN scale into weight rows
            w2 = jnp.transpose(w3, (0, 2, 1)).reshape(out_channels, kernel * in_channels)
            w2 = w2 * scale
            add(w2 if in_channels == 1 else w2.astype(jnp.bfloat16))
            add(shift)
            n_refs = 2
            if residual:
                add(jnp.full((1, 1), 0.25, jnp.float32), smem=True)
                n_refs += 1
            cfg = dict(type="dense", K=kernel, pad=pad, C_in=in_channels,
                       C_out=out_channels, L_in=L, L_out=L_out,
                       residual=residual, n_refs=n_refs)
        else:
            has_expansion = (i != 0) and (in_channels != out_channels)
            assert has_expansion or in_channels == out_channels, (
                "separable block without expansion requires C_in == C_out")
            n_refs = 0
            vec_cols = []
            if has_expansion:
                esc, esh = make_bn(out_channels, kg)
                we = winit(kg, (out_channels, in_channels), in_channels) * esc
                add(we.astype(jnp.bfloat16))
                vec_cols.append(("esh", esh))
                n_refs += 1
            dsc, dsh = make_bn(out_channels, kg)
            wd = winit(kg, (out_channels, kernel), kernel) * dsc   # depthwise f32 (VPU)
            add(wd)
            vec_cols.append(("dsh", dsh))
            n_refs += 1
            use_sqex = bool(sqex)
            if use_sqex:
                R = sqex_reduction
                add(winit(kg, (out_channels, R), out_channels))    # fc1.weight.T (C, R)
                add(0.01 * jax.random.normal(kg(), (1, R), jnp.float32))
                add(winit(kg, (out_channels, R), R))               # fc2.weight   (C, R)
                vec_cols.append(
                    ("b2", 0.01 * jax.random.normal(kg(), (out_channels, 1), jnp.float32)))
                n_refs += 3
            psc, psh = make_bn(out_channels, kg)
            wp = winit(kg, (out_channels, out_channels), out_channels) * psc
            add(wp.astype(jnp.bfloat16))
            vec_cols.append(("psh", psh))
            n_refs += 1
            # pack all per-channel (C,1) vectors of this block into one lane-padded slab
            add(jnp.concatenate([v for _, v in vec_cols], axis=1))
            n_refs += 1
            cols = {name: j for j, (name, _) in enumerate(vec_cols)}
            if residual:
                # PyTorch inits rezero to 0; nonzero here so the branch is exercised.
                add(jnp.full((1, 1), 0.25, jnp.float32), smem=True)
                n_refs += 1
            Lpad = _round_up(L + 2 * pad, 128)                     # lane-aligned scratch
            cfg = dict(type="sep", K=kernel, pad=pad, C=out_channels,
                       L_in=L, L_out=L_out, Lpad=Lpad, expansion=has_expansion,
                       residual=residual, sqex=use_sqex, cols=cols, n_refs=n_refs)
            sep_dims.append((out_channels, Lpad))

        layer_cfgs.append(cfg)
        in_channels = out_channels
        L = L_out

    # final Linear head, channel-major (Vp, C); vocab padded to a full sublane group so
    # the output store is unmasked; padded bias rows = -1e9 (exp() underflows to 0).
    Vp = _round_up(vocab_size, 8)
    wf = winit(kg, (vocab_size, in_channels), in_channels)          # torch weight (V, C)
    bf = 0.01 * jax.random.normal(kg(), (vocab_size, 1), jnp.float32)
    wf_p = jnp.zeros((Vp, in_channels), jnp.float32).at[:vocab_size].set(wf)
    bf_p = jnp.full((Vp, 1), -1e9, jnp.float32).at[:vocab_size].set(bf)
    add(wf_p.astype(jnp.bfloat16))
    add(bf_p)

    # ONE shared depthwise scratch sized to the largest separable block.
    scratch = []
    if sep_dims:
        Cmax = _round_up(max(c for c, _ in sep_dims), 8)
        Lpm = max(l for _, l in sep_dims)
        scratch = [pltpu.VMEM((Cmax, Lpm), jnp.float32)]

    return dict(layer_cfgs=layer_cfgs, flat_params=flat, param_descs=descs,
                scratch_shapes=scratch, L_final=L, V=vocab_size, Vp=Vp,
                C_in0=1, L_in0=seqlen, roll_mode=roll_mode, buffered1=buffered1)


def _make_param_specs(descs, buffered1):
    specs = []
    for d in descs:
        if d["smem"]:
            specs.append(pl.BlockSpec(memory_space=pltpu.MemorySpace.SMEM))
        elif buffered1:
            specs.append(pl.BlockSpec(d["shape"],
                                      lambda n, nd=len(d["shape"]): (0,) * nd,
                                      pipeline_mode=pl.Buffered(1)))
        else:
            specs.append(pl.BlockSpec(d["shape"],
                                      lambda n, nd=len(d["shape"]): (0,) * nd))
    return specs


def network_forward(x, net):
    N = x.shape[0]
    C_in0, L0 = net["C_in0"], net["L_in0"]
    V, Vp, Lf = net["V"], net["Vp"], net["L_final"]
    n_in = 1 + len(net["flat_params"])
    has_scratch = bool(net["scratch_shapes"])
    kernel = _make_fused_kernel(net["layer_cfgs"], n_in, net["roll_mode"], has_scratch)

    def run(buffered1):
        param_specs = _make_param_specs(net["param_descs"], buffered1)
        return pl.pallas_call(
            kernel,
            grid=(N,),
            in_specs=[pl.BlockSpec((1, C_in0, L0), lambda n: (n, 0, 0))] + param_specs,
            out_specs=pl.BlockSpec((1, Vp, Lf), lambda n: (n, 0, 0)),
            out_shape=jax.ShapeDtypeStruct((N, Vp, Lf), jnp.float32),
            scratch_shapes=net["scratch_shapes"],
            compiler_params=pltpu.CompilerParams(
                dimension_semantics=("parallel",),
                vmem_limit_bytes=_vmem_limit_bytes()),
        )(x, *net["flat_params"])

    if net["buffered1"]:
        try:
            out = run(True)
        except Exception:
            out = run(False)                          # safety net: plain param specs
    else:
        out = run(False)

    # slice off vocab padding, then (L, N, V) as in PyTorch (plain-JAX glue)
    return jnp.transpose(out[:, :V, :], (2, 0, 1))


# --------------------------------------------------------------------------------------
if __name__ == "__main__":
    # Small arch consistent with the module's layer format:
    # [padding, out_ch, seperable, kernel, stride, sqex, dropout]
    SMALL_ARCH = [
        [-1, 8, 0, 3, 1, 1, 0],
        [-1, 16, 1, 5, 1, 1, 1],
        [-1, 16, 1, 5, 1, 1, 1],
    ]
    N, L = 2, 16
    VOCAB = 5            # ['<PAD>', 'A', 'C', 'G', 'T']
    SQEX_R = 4           # small analogue of config.sqex_reduction

    kg = KeyGen(0)
    net = build_network(SMALL_ARCH, L, VOCAB, SQEX_R, kg)
    x = jax.random.normal(jax.random.PRNGKey(0), (N, 1, L), jnp.float32)

    out = network_forward(x, net)
    out = jax.block_until_ready(out)

    assert out.shape == (net["L_final"], N, VOCAB), out.shape
    # log_softmax sanity: probabilities sum to 1 along the vocab axis
    sums = jnp.sum(jnp.exp(out), axis=-1)
    assert bool(jnp.all(jnp.abs(sums - 1.0) < 1e-4)), "log_softmax check failed"
    print("KERNEL_OK")
</pallas_src>

<mosaic_0001>
module attributes {stable_mosaic.version = 11 : i64} {
  func.func @k(%arg0: memref<8x128xi32, #tpu.memory_space<vmem>>, %arg1: memref<8x128xi32, #tpu.memory_space<vmem>>) attributes {dimension_semantics = [], scalar_prefetch = 0 : i64, scratch_operands = 0 : i64, tpu.core_type = #tpu.core_type<tc>} {
    %c0 = arith.constant 0 : index
    %c0_0 = arith.constant 0 : index
    %0 = vector.load %arg0[%c0, %c0_0] : memref<8x128xi32, #tpu.memory_space<vmem>>, vector<8x128xi32>
    %c1_i32 = arith.constant 1 : i32
    %1 = tpu.dynamic_rotate %0 by %c1_i32 dim 1 : vector<8x128xi32>, i32 -> vector<8x128xi32>
    %c0_1 = arith.constant 0 : index
    %c0_2 = arith.constant 0 : index
    %2 = vector.load %arg1[%c0_1, %c0_2] : memref<8x128xi32, #tpu.memory_space<vmem>>, vector<8x128xi32>
    tpu.vector_store %arg1[%c0_1, %c0_2], %1 {strides = array<i32>} : memref<8x128xi32, #tpu.memory_space<vmem>>, vector<8x128xi32>,
    return
  }
}

module attributes {stable_mosaic.version = 11 : i64} {
  func.func @k(%arg0: i32, %arg1: memref<1x8x128xf32, #tpu.memory_space<vmem>>, %arg2: memref<8x128xf32, #tpu.memory_space<vmem>>, %arg3: memref<1x8x128xf32, #tpu.memory_space<vmem>>) attributes {dimension_semantics = [#tpu.dimension_semantics<arbitrary>], iteration_bounds = array<i64: 2>, scalar_prefetch = 0 : i64, scratch_operands = 0 : i64, tpu.core_type = #tpu.core_type<tc>, window_params = [{transform_indices = @transform_0, window_bounds = array<i64: 1, 8, 128>}, {pipeline_mode = #tpu.pipeline_mode<synchronous>, transform_indices = @transform_1, window_bounds = array<i64: 8, 128>}, {transform_indices = @transform_2, window_bounds = array<i64: 1, 8, 128>}]} {
    %c0 = arith.constant 0 : index
    %c0_0 = arith.constant 0 : index
    %c0_1 = arith.constant 0 : index
    %0 = vector.load %arg1[%c0, %c0_0, %c0_1] : memref<1x8x128xf32, #tpu.memory_space<vmem>>, vector<1x8x128xf32>
    %c0_2 = arith.constant 0 : index
    %c0_3 = arith.constant 0 : index
    %1 = vector.load %arg2[%c0_2, %c0_3] : memref<8x128xf32, #tpu.memory_space<vmem>>, vector<8x128xf32>
    %2 = vector.shape_cast %1 : vector<8x128xf32> to vector<1x8x128xf32>
    %3 = arith.addf %0, %2 : vector<1x8x128xf32>
    %c0_4 = arith.constant 0 : index
    %c0_5 = arith.constant 0 : index
    %c0_6 = arith.constant 0 : index
    %4 = vector.load %arg3[%c0_4, %c0_5, %c0_6] : memref<1x8x128xf32, #tpu.memory_space<vmem>>, vector<1x8x128xf32>
    tpu.vector_store %arg3[%c0_4, %c0_5, %c0_6], %3 {strides = array<i32>} : memref<1x8x128xf32, #tpu.memory_space<vmem>>, vector<1x8x128xf32>,
    return
  }
  func.func @transform_0(%arg0: i32) -> (i32, i32, i32) {
    %c0_i32 = arith.constant 0 : i32
    %c0_i32_0 = arith.constant 0 : i32
    %c0_i32_1 = arith.constant 0 : i32
    return %arg0, %c0_i32, %c0_i32_0 : i32, i32, i32
  }
  func.func @transform_1(%arg0: i32) -> (i32, i32) {
    %c0_i32 = arith.constant 0 : i32
    %c0_i32_0 = arith.constant 0 : i32
    %c0_i32_1 = arith.constant 0 : i32
    return %c0_i32, %c0_i32_0 : i32, i32
  }
  func.func @transform_2(%arg0: i32) -> (i32, i32, i32) {
    %c0_i32 = arith.constant 0 : i32
    %c0_i32_0 = arith.constant 0 : i32
    %c0_i32_1 = arith.constant 0 : i32
    return %arg0, %c0_i32, %c0_i32_0 : i32, i32, i32
  }
}

module attributes {stable_mosaic.version = 11 : i64} {
  func.func @kernel(%arg0: i32, %arg1: memref<1x1x16xf32, #tpu.memory_space<vmem>>, %arg2: memref<8x3xf32, #tpu.memory_space<vmem>>, %arg3: memref<8x1xf32, #tpu.memory_space<vmem>>, %arg4: memref<16x8xbf16, #tpu.memory_space<vmem>>, %arg5: memref<16x5xf32, #tpu.memory_space<vmem>>, %arg6: memref<16x4xf32, #tpu.memory_space<vmem>>, %arg7: memref<1x4xf32, #tpu.memory_space<vmem>>, %arg8: memref<16x4xf32, #tpu.memory_space<vmem>>, %arg9: memref<16x16xbf16, #tpu.memory_space<vmem>>, %arg10: memref<16x4xf32, #tpu.memory_space<vmem>>, %arg11: memref<16x5xf32, #tpu.memory_space<vmem>>, %arg12: memref<16x4xf32, #tpu.memory_space<vmem>>, %arg13: memref<1x4xf32, #tpu.memory_space<vmem>>, %arg14: memref<16x4xf32, #tpu.memory_space<vmem>>, %arg15: memref<16x16xbf16, #tpu.memory_space<vmem>>, %arg16: memref<16x3xf32, #tpu.memory_space<vmem>>, %arg17: memref<1x1xf32, #tpu.memory_space<smem>>, %arg18: memref<8x16xbf16, #tpu.memory_space<vmem>>, %arg19: memref<8x1xf32, #tpu.memory_space<vmem>>, %arg20: memref<1x8x16xf32, #tpu.memory_space<vmem>>, %arg21: memref<16x128xf32, #tpu.memory_space<vmem>>) attributes {dimension_semantics = [#tpu.dimension_semantics<parallel>], iteration_bounds = array<i64: 2>, scalar_prefetch = 0 : i64, scratch_operands = 1 : i64, tpu.core_type = #tpu.core_type<tc>, window_params = [{transform_indices = @transform_0, window_bounds = array<i64: 1, 1, 16>}, {pipeline_mode = #tpu.pipeline_mode<synchronous>, transform_indices = @transform_1, window_bounds = array<i64: 8, 3>}, {pipeline_mode = #tpu.pipeline_mode<synchronous>, transform_indices = @transform_2, window_bounds = array<i64: 8, 1>}, {pipeline_mode = #tpu.pipeline_mode<synchronous>, transform_indices = @transform_3, window_bounds = array<i64: 16, 8>}, {pipeline_mode = #tpu.pipeline_mode<synchronous>, transform_indices = @transform_4, window_bounds = array<i64: 16, 5>}, {pipeline_mode = #tpu.pipeline_mode<synchronous>, transform_indices = @transform_5, window_bounds = array<i64: 16, 4>}, {pipeline_mode = #tpu.pipeline_mode<synchronous>, transform_indices = @transform_6, window_bounds = array<i64: 1, 4>}, {pipeline_mode = #tpu.pipeline_mode<synchronous>, transform_indices = @transform_7, window_bounds = array<i64: 16, 4>}, {pipeline_mode = #tpu.pipeline_mode<synchronous>, transform_indices = @transform_8, window_bounds = array<i64: 16, 16>}, {pipeline_mode = #tpu.pipeline_mode<synchronous>, transform_indices = @transform_9, window_bounds = array<i64: 16, 4>}, {pipeline_mode = #tpu.pipeline_mode<synchronous>, transform_indices = @transform_10, window_bounds = array<i64: 16, 5>}, {pipeline_mode = #tpu.pipeline_mode<synchronous>, transform_indices = @transform_11, window_bounds = array<i64: 16, 4>}, {pipeline_mode = #tpu.pipeline_mode<synchronous>, transform_indices = @transform_12, window_bounds = array<i64: 1, 4>}, {pipeline_mode = #tpu.pipeline_mode<synchronous>, transform_indices = @transform_13, window_bounds = array<i64: 16, 4>}, {pipeline_mode = #tpu.pipeline_mode<synchronous>, transform_indices = @transform_14, window_bounds = array<i64: 16, 16>}, {pipeline_mode = #tpu.pipeline_mode<synchronous>, transform_indices = @transform_15, window_bounds = array<i64: 16, 3>}, {transform_indices = @transform_16, window_bounds = array<i64: 1, 1>}, {pipeline_mode = #tpu.pipeline_mode<synchronous>, transform_indices = @transform_17, window_bounds = array<i64: 8, 16>}, {pipeline_mode = #tpu.pipeline_mode<synchronous>, transform_indices = @transform_18, window_bounds = array<i64: 8, 1>}, {transform_indices = @transform_19, window_bounds = array<i64: 1, 8, 16>}]} {
    %c0 = arith.constant 0 : index
    %c0_0 = arith.constant 0 : index
    %c0_1 = arith.constant 0 : index
    %0 = vector.load %arg1[%c0, %c0_0, %c0_1] : memref<1x1x16xf32, #tpu.memory_space<vmem>>, vector<1x1x16xf32>
    %1 = vector.shape_cast %0 : vector<1x1x16xf32> to vector<1x16xf32>
    %cst = arith.constant 0.000000e+00 : f32
    %2 = vector.broadcast %cst : f32 to vector<1x1xf32>
    %3 = tpu.concatenate %2, %1, %2 in 1 : vector<1x1xf32>, vector<1x16xf32>, vector<1x1xf32> -> vector<1x18xf32>
    %c0_2 = arith.constant 0 : index
    %c0_3 = arith.constant 0 : index
    %4 = vector.load %arg2[%c0_2, %c0_3] : memref<8x3xf32, #tpu.memory_space<vmem>>, vector<8x3xf32>
    %5 = vector.extract_strided_slice %4 {offsets = [0, 0], sizes = [8, 1], strides = [1, 1]} : vector<8x3xf32> to vector<8x1xf32>
    %6 = vector.extract_strided_slice %3 {offsets = [0, 0], sizes = [1, 16], strides = [1, 1]} : vector<1x18xf32> to vector<1x16xf32>
    %7 = vector.broadcast %5 : vector<8x1xf32> to vector<8x16xf32>
    %8 = vector.broadcast %6 : vector<1x16xf32> to vector<8x16xf32>
    %9 = arith.mulf %7, %8 : vector<8x16xf32>
    %10 = vector.extract_strided_slice %4 {offsets = [0, 1], sizes = [8, 1], strides = [1, 1]} : vector<8x3xf32> to vector<8x1xf32>
    %11 = vector.extract_strided_slice %3 {offsets = [0, 1], sizes = [1, 16], strides = [1, 1]} : vector<1x18xf32> to vector<1x16xf32>
    %12 = vector.broadcast %10 : vector<8x1xf32> to vector<8x16xf32>
    %13 = vector.broadcast %11 : vector<1x16xf32> to vector<8x16xf32>
    %14 = arith.mulf %12, %13 : vector<8x16xf32>
    %15 = vector.extract_strided_slice %4 {offsets = [0, 2], sizes = [8, 1], strides = [1, 1]} : vector<8x3xf32> to vector<8x1xf32>
    %16 = vector.extract_strided_slice %3 {offsets = [0, 2], sizes = [1, 16], strides = [1, 1]} : vector<1x18xf32> to vector<1x16xf32>
    %17 = vector.broadcast %15 : vector<8x1xf32> to vector<8x16xf32>
    %18 = vector.broadcast %16 : vector<1x16xf32> to vector<8x16xf32>
    %19 = arith.mulf %17, %18 : vector<8x16xf32>
    %20 = arith.addf %9, %19 : vector<8x16xf32>
    %21 = arith.addf %20, %14 : vector<8x16xf32>
    %c0_4 = arith.constant 0 : index
    %c0_5 = arith.constant 0 : index
    %22 = vector.load %arg3[%c0_4, %c0_5] : memref<8x1xf32, #tpu.memory_space<vmem>>, vector<8x1xf32>
    %23 = vector.broadcast %22 : vector<8x1xf32> to vector<8x16xf32>
    %24 = arith.addf %21, %23 : vector<8x16xf32>
    %cst_6 = arith.constant 2.000000e+01 : f32
    %25 = vector.broadcast %cst_6 : f32 to vector<8x16xf32>
    %26 = arith.minimumf %24, %25 : vector<8x16xf32>
    %27 = math.exp %26 : vector<8x16xf32>
    %cst_7 = arith.constant 2.000000e+00 : f32
    %28 = vector.broadcast %cst_7 : f32 to vector<8x16xf32>
    %29 = arith.addf %27, %28 : vector<8x16xf32>
    %30 = arith.mulf %27, %29 : vector<8x16xf32>
    %31 = arith.mulf %24, %30 : vector<8x16xf32>
    %cst_8 = arith.constant 2.000000e+00 : f32
    %32 = vector.broadcast %cst_8 : f32 to vector<8x16xf32>
    %33 = arith.addf %30, %32 : vector<8x16xf32>
    %34 = tpu.reciprocal %33 {approx = true} : vector<8x16xf32> -> vector<8x16xf32>
    %35 = arith.mulf %31, %34 : vector<8x16xf32>
    %cst_9 = arith.constant 2.000000e+01 : f32
    %36 = vector.broadcast %cst_9 : f32 to vector<8x16xf32>
    %37 = arith.cmpf ogt, %24, %36 : vector<8x16xf32>
    %38 = arith.select %37, %24, %35 : vector<8x16xi1>, vector<8x16xf32>
    %c0_10 = arith.constant 0 : index
    %c0_11 = arith.constant 0 : index
    %39 = vector.load %arg10[%c0_10, %c0_11] : memref<16x4xf32, #tpu.memory_space<vmem>>, vector<16x4xf32>
    %c0_12 = arith.constant 0 : index
    %c0_13 = arith.constant 0 : index
    %40 = vector.load %arg4[%c0_12, %c0_13] : memref<16x8xbf16, #tpu.memory_space<vmem>>, vector<16x8xbf16>
    %41 = arith.truncf %38 : vector<8x16xf32> to vector<8x16xbf16>
    %cst_14 = arith.constant dense<0.000000e+00> : vector<16x16xf32>
    %42 = tpu.matmul %40, %41, %cst_14 {dimension_numbers = #tpu.dot_dimension_numbers<[1], [0], [0], [1], [0, 0, 1, 1], [], []>} : vector<16x8xbf16>, vector<8x16xbf16>, vector<16x16xf32> -> vector<16x16xf32>
    %43 = vector.extract_strided_slice %39 {offsets = [0, 0], sizes = [16, 1], strides = [1, 1]} : vector<16x4xf32> to vector<16x1xf32>
    %44 = vector.broadcast %43 : vector<16x1xf32> to vector<16x16xf32>
    %45 = arith.addf %42, %44 : vector<16x16xf32>
    %cst_15 = arith.constant 2.000000e+01 : f32
    %46 = vector.broadcast %cst_15 : f32 to vector<16x16xf32>
    %47 = arith.minimumf %45, %46 : vector<16x16xf32>
    %48 = math.exp %47 : vector<16x16xf32>
    %cst_16 = arith.constant 2.000000e+00 : f32
    %49 = vector.broadcast %cst_16 : f32 to vector<16x16xf32>
    %50 = arith.addf %48, %49 : vector<16x16xf32>
    %51 = arith.mulf %48, %50 : vector<16x16xf32>
    %52 = arith.mulf %45, %51 : vector<16x16xf32>
    %cst_17 = arith.constant 2.000000e+00 : f32
    %53 = vector.broadcast %cst_17 : f32 to vector<16x16xf32>
    %54 = arith.addf %51, %53 : vector<16x16xf32>
    %55 = tpu.reciprocal %54 {approx = true} : vector<16x16xf32> -> vector<16x16xf32>
    %56 = arith.mulf %52, %55 : vector<16x16xf32>
    %cst_18 = arith.constant 2.000000e+01 : f32
    %57 = vector.broadcast %cst_18 : f32 to vector<16x16xf32>
    %58 = arith.cmpf ogt, %45, %57 : vector<16x16xf32>
    %59 = arith.select %58, %45, %56 : vector<16x16xi1>, vector<16x16xf32>
    %c0_19 = arith.constant 0 : index
    %c0_20 = arith.constant 0 : index
    %60 = vector.load %arg5[%c0_19, %c0_20] : memref<16x5xf32, #tpu.memory_space<vmem>>, vector<16x5xf32>
    %cst_21 = arith.constant 0.000000e+00 : f32
    %61 = vector.broadcast %cst_21 : f32 to vector<16x2xf32>
    %c0_22 = arith.constant 0 : index
    %c0_23 = arith.constant 0 : index
    %62 = vector.load %arg21[%c0_22, %c0_23] : memref<16x128xf32, #tpu.memory_space<vmem>>, vector<16x2xf32>
    tpu.vector_store %arg21[%c0_22, %c0_23], %61 {strides = array<i32>} : memref<16x128xf32, #tpu.memory_space<vmem>>, vector<16x2xf32>,
    %c0_24 = arith.constant 0 : index
    %c2 = arith.constant 2 : index
    %63 = vector.load %arg21[%c0_24, %c2] : memref<16x128xf32, #tpu.memory_space<vmem>>, vector<16x16xf32>
    tpu.vector_store %arg21[%c0_24, %c2], %59 {strides = array<i32>} : memref<16x128xf32, #tpu.memory_space<vmem>>, vector<16x16xf32>,
    %cst_25 = arith.constant 0.000000e+00 : f32
    %64 = vector.broadcast %cst_25 : f32 to vector<16x110xf32>
    %c0_26 = arith.constant 0 : index
    %c18 = arith.constant 18 : index
    %65 = vector.load %arg21[%c0_26, %c18] : memref<16x128xf32, #tpu.memory_space<vmem>>, vector<16x110xf32>
    tpu.vector_store %arg21[%c0_26, %c18], %64 {strides = array<i32>} : memref<16x128xf32, #tpu.memory_space<vmem>>, vector<16x110xf32>,
    %c0_27 = arith.constant 0 : index
    %c0_28 = arith.constant 0 : index
    %66 = vector.load %arg21[%c0_27, %c0_28] : memref<16x128xf32, #tpu.memory_space<vmem>>, vector<16x128xf32>
    %67 = vector.extract_strided_slice %60 {offsets = [0, 0], sizes = [16, 1], strides = [1, 1]} : vector<16x5xf32> to vector<16x1xf32>
    %68 = vector.extract_strided_slice %66 {offsets = [0, 0], sizes = [16, 16], strides = [1, 1]} : vector<16x128xf32> to vector<16x16xf32>
    %69 = vector.broadcast %67 : vector<16x1xf32> to vector<16x16xf32>
    %70 = arith.mulf %69, %68 : vector<16x16xf32>
    %71 = vector.extract_strided_slice %60 {offsets = [0, 1], sizes = [16, 1], strides = [1, 1]} : vector<16x5xf32> to vector<16x1xf32>
    %72 = vector.extract_strided_slice %66 {offsets = [0, 1], sizes = [16, 16], strides = [1, 1]} : vector<16x128xf32> to vector<16x16xf32>
    %73 = vector.broadcast %71 : vector<16x1xf32> to vector<16x16xf32>
    %74 = arith.mulf %73, %72 : vector<16x16xf32>
    %75 = vector.extract_strided_slice %60 {offsets = [0, 2], sizes = [16, 1], strides = [1, 1]} : vector<16x5xf32> to vector<16x1xf32>
    %76 = vector.extract_strided_slice %66 {offsets = [0, 2], sizes = [16, 16], strides = [1, 1]} : vector<16x128xf32> to vector<16x16xf32>
    %77 = vector.broadcast %75 : vector<16x1xf32> to vector<16x16xf32>
    %78 = arith.mulf %77, %76 : vector<16x16xf32>
    %79 = vector.extract_strided_slice %60 {offsets = [0, 3], sizes = [16, 1], strides = [1, 1]} : vector<16x5xf32> to vector<16x1xf32>
    %80 = vector.extract_strided_slice %66 {offsets = [0, 3], sizes = [16, 16], strides = [1, 1]} : vector<16x128xf32> to vector<16x16xf32>
    %81 = vector.broadcast %79 : vector<16x1xf32> to vector<16x16xf32>
    %82 = arith.mulf %81, %80 : vector<16x16xf32>
    %83 = vector.extract_strided_slice %60 {offsets = [0, 4], sizes = [16, 1], strides = [1, 1]} : vector<16x5xf32> to vector<16x1xf32>
    %84 = vector.extract_strided_slice %66 {offsets = [0, 4], sizes = [16, 16], strides = [1, 1]} : vector<16x128xf32> to vector<16x16xf32>
    %85 = vector.broadcast %83 : vector<16x1xf32> to vector<16x16xf32>
    %86 = arith.mulf %85, %84 : vector<16x16xf32>
    %87 = arith.addf %70, %78 : vector<16x16xf32>
    %88 = arith.addf %74, %82 : vector<16x16xf32>
    %89 = arith.addf %87, %86 : vector<16x16xf32>
    %90 = arith.addf %89, %88 : vector<16x16xf32>
    %91 = vector.extract_strided_slice %39 {offsets = [0, 1], sizes = [16, 1], strides = [1, 1]} : vector<16x4xf32> to vector<16x1xf32>
    %92 = vector.broadcast %91 : vector<16x1xf32> to vector<16x16xf32>
    %93 = arith.addf %90, %92 : vector<16x16xf32>
    %cst_29 = arith.constant 2.000000e+01 : f32
    %94 = vector.broadcast %cst_29 : f32 to vector<16x16xf32>
    %95 = arith.minimumf %93, %94 : vector<16x16xf32>
    %96 = math.exp %95 : vector<16x16xf32>
    %cst_30 = arith.constant 2.000000e+00 : f32
    %97 = vector.broadcast %cst_30 : f32 to vector<16x16xf32>
    %98 = arith.addf %96, %97 : vector<16x16xf32>
    %99 = arith.mulf %96, %98 : vector<16x16xf32>
    %100 = arith.mulf %93, %99 : vector<16x16xf32>
    %cst_31 = arith.constant 2.000000e+00 : f32
    %101 = vector.broadcast %cst_31 : f32 to vector<16x16xf32>
    %102 = arith.addf %99, %101 : vector<16x16xf32>
    %103 = tpu.reciprocal %102 {approx = true} : vector<16x16xf32> -> vector<16x16xf32>
    %104 = arith.mulf %100, %103 : vector<16x16xf32>
    %cst_32 = arith.constant 2.000000e+01 : f32
    %105 = vector.broadcast %cst_32 : f32 to vector<16x16xf32>
    %106 = arith.cmpf ogt, %93, %105 : vector<16x16xf32>
    %107 = arith.select %106, %93, %104 : vector<16x16xi1>, vector<16x16xf32>
    %cst_33 = arith.constant dense<0.000000e+00> : vector<16xf32>
    %108 = vector.multi_reduction <add>, %107, %cst_33 [1] : vector<16x16xf32> to vector<16xf32>
    %109 = vector.shape_cast %108 : vector<16xf32> to vector<16x1xf32>
    %cst_34 = arith.constant 1.600000e+01 : f32
    %110 = vector.broadcast %cst_34 : f32 to vector<16x1xf32>
    %111 = arith.divf %109, %110 : vector<16x1xf32>
    %c0_35 = arith.constant 0 : index
    %c0_36 = arith.constant 0 : index
    %112 = vector.load %arg6[%c0_35, %c0_36] : memref<16x4xf32, #tpu.memory_space<vmem>>, vector<16x4xf32>
    %113 = vector.broadcast %111 : vector<16x1xf32> to vector<16x4xf32>
    %114 = arith.mulf %112, %113 : vector<16x4xf32>
    %cst_37 = arith.constant dense<0.000000e+00> : vector<4xf32>
    %115 = vector.multi_reduction <add>, %114, %cst_37 [0] : vector<16x4xf32> to vector<4xf32>
    %116 = vector.shape_cast %115 : vector<4xf32> to vector<1x4xf32>
    %c0_38 = arith.constant 0 : index
    %c0_39 = arith.constant 0 : index
    %117 = vector.load %arg7[%c0_38, %c0_39] : memref<1x4xf32, #tpu.memory_space<vmem>>, vector<1x4xf32>
    %118 = arith.addf %116, %117 : vector<1x4xf32>
    %cst_40 = arith.constant 2.000000e+01 : f32
    %119 = vector.broadcast %cst_40 : f32 to vector<1x4xf32>
    %120 = arith.minimumf %118, %119 : vector<1x4xf32>
    %121 = math.exp %120 : vector<1x4xf32>
    %cst_41 = arith.constant 2.000000e+00 : f32
    %122 = vector.broadcast %cst_41 : f32 to vector<1x4xf32>
    %123 = arith.addf %121, %122 : vector<1x4xf32>
    %124 = arith.mulf %121, %123 : vector<1x4xf32>
    %125 = arith.mulf %118, %124 : vector<1x4xf32>
    %cst_42 = arith.constant 2.000000e+00 : f32
    %126 = vector.broadcast %cst_42 : f32 to vector<1x4xf32>
    %127 = arith.addf %124, %126 : vector<1x4xf32>
    %128 = tpu.reciprocal %127 {approx = true} : vector<1x4xf32> -> vector<1x4xf32>
    %129 = arith.mulf %125, %128 : vector<1x4xf32>
    %cst_43 = arith.constant 2.000000e+01 : f32
    %130 = vector.broadcast %cst_43 : f32 to vector<1x4xf32>
    %131 = arith.cmpf ogt, %118, %130 : vector<1x4xf32>
    %132 = arith.select %131, %118, %129 : vector<1x4xi1>, vector<1x4xf32>
    %c0_44 = arith.constant 0 : index
    %c0_45 = arith.constant 0 : index
    %133 = vector.load %arg8[%c0_44, %c0_45] : memref<16x4xf32, #tpu.memory_space<vmem>>, vector<16x4xf32>
    %134 = vector.broadcast %132 : vector<1x4xf32> to vector<16x4xf32>
    %135 = arith.mulf %133, %134 : vector<16x4xf32>
    %cst_46 = arith.constant dense<0.000000e+00> : vector<16xf32>
    %136 = vector.multi_reduction <add>, %135, %cst_46 [1] : vector<16x4xf32> to vector<16xf32>
    %137 = vector.shape_cast %136 : vector<16xf32> to vector<16x1xf32>
    %138 = vector.extract_strided_slice %39 {offsets = [0, 2], sizes = [16, 1], strides = [1, 1]} : vector<16x4xf32> to vector<16x1xf32>
    %139 = arith.addf %137, %138 : vector<16x1xf32>
    %140 = math.absf %139 : vector<16x1xf32>
    %cst_47 = arith.constant 0.000000e+00 : f32
    %141 = vector.broadcast %cst_47 : f32 to vector<16x1xf32>
    %142 = arith.subf %141, %140 : vector<16x1xf32>
    %143 = math.exp %142 : vector<16x1xf32>
    %cst_48 = arith.constant 1.000000e+00 : f32
    %144 = vector.broadcast %cst_48 : f32 to vector<16x1xf32>
    %145 = arith.addf %144, %143 : vector<16x1xf32>
    %146 = tpu.reciprocal %145 {approx = true} : vector<16x1xf32> -> vector<16x1xf32>
    %cst_49 = arith.constant 0.000000e+00 : f32
    %147 = vector.broadcast %cst_49 : f32 to vector<16x1xf32>
    %148 = arith.cmpf oge, %139, %147 : vector<16x1xf32>
    %149 = arith.mulf %143, %146 : vector<16x1xf32>
    %150 = arith.select %148, %146, %149 : vector<16x1xi1>, vector<16x1xf32>
    %151 = vector.broadcast %150 : vector<16x1xf32> to vector<16x16xf32>
    %152 = arith.mulf %107, %151 : vector<16x16xf32>
    %c0_50 = arith.constant 0 : index
    %c0_51 = arith.constant 0 : index
    %153 = vector.load %arg9[%c0_50, %c0_51] : memref<16x16xbf16, #tpu.memory_space<vmem>>, vector<16x16xbf16>
    %154 = arith.truncf %152 : vector<16x16xf32> to vector<16x16xbf16>
    %cst_52 = arith.constant dense<0.000000e+00> : vector<16x16xf32>
    %155 = tpu.matmul %153, %154, %cst_52 {dimension_numbers = #tpu.dot_dimension_numbers<[1], [0], [0], [1], [0, 0, 1, 1], [], []>} : vector<16x16xbf16>, vector<16x16xbf16>, vector<16x16xf32> -> vector<16x16xf32>
    %156 = vector.extract_strided_slice %39 {offsets = [0, 3], sizes = [16, 1], strides = [1, 1]} : vector<16x4xf32> to vector<16x1xf32>
    %157 = vector.broadcast %156 : vector<16x1xf32> to vector<16x16xf32>
    %158 = arith.addf %155, %157 : vector<16x16xf32>
    %cst_53 = arith.constant 2.000000e+01 : f32
    %159 = vector.broadcast %cst_53 : f32 to vector<16x16xf32>
    %160 = arith.minimumf %158, %159 : vector<16x16xf32>
    %161 = math.exp %160 : vector<16x16xf32>
    %cst_54 = arith.constant 2.000000e+00 : f32
    %162 = vector.broadcast %cst_54 : f32 to vector<16x16xf32>
    %163 = arith.addf %161, %162 : vector<16x16xf32>
    %164 = arith.mulf %161, %163 : vector<16x16xf32>
    %165 = arith.mulf %158, %164 : vector<16x16xf32>
    %cst_55 = arith.constant 2.000000e+00 : f32
    %166 = vector.broadcast %cst_55 : f32 to vector<16x16xf32>
    %167 = arith.addf %164, %166 : vector<16x16xf32>
    %168 = tpu.reciprocal %167 {approx = true} : vector<16x16xf32> -> vector<16x16xf32>
    %169 = arith.mulf %165, %168 : vector<16x16xf32>
    %cst_56 = arith.constant 2.000000e+01 : f32
    %170 = vector.broadcast %cst_56 : f32 to vector<16x16xf32>
    %171 = arith.cmpf ogt, %158, %170 : vector<16x16xf32>
    %172 = arith.select %171, %158, %169 : vector<16x16xi1>, vector<16x16xf32>
    %c0_57 = arith.constant 0 : index
    %c0_58 = arith.constant 0 : index
    %173 = vector.load %arg16[%c0_57, %c0_58] : memref<16x3xf32, #tpu.memory_space<vmem>>, vector<16x3xf32>
    %c0_59 = arith.constant 0 : index
    %c0_60 = arith.constant 0 : index
    %174 = vector.load %arg11[%c0_59, %c0_60] : memref<16x5xf32, #tpu.memory_space<vmem>>, vector<16x5xf32>
    %cst_61 = arith.constant 0.000000e+00 : f32
    %175 = vector.broadcast %cst_61 : f32 to vector<16x2xf32>
    %c0_62 = arith.constant 0 : index
    %c0_63 = arith.constant 0 : index
    %176 = vector.load %arg21[%c0_62, %c0_63] : memref<16x128xf32, #tpu.memory_space<vmem>>, vector<16x2xf32>
    tpu.vector_store %arg21[%c0_62, %c0_63], %175 {strides = array<i32>} : memref<16x128xf32, #tpu.memory_space<vmem>>, vector<16x2xf32>,
    %c0_64 = arith.constant 0 : index
    %c2_65 = arith.constant 2 : index
    %177 = vector.load %arg21[%c0_64, %c2_65] : memref<16x128xf32, #tpu.memory_space<vmem>>, vector<16x16xf32>
    tpu.vector_store %arg21[%c0_64, %c2_65], %172 {strides = array<i32>} : memref<16x128xf32, #tpu.memory_space<vmem>>, vector<16x16xf32>,
    %cst_66 = arith.constant 0.000000e+00 : f32
    %178 = vector.broadcast %cst_66 : f32 to vector<16x110xf32>
    %c0_67 = arith.constant 0 : index
    %c18_68 = arith.constant 18 : index
    %179 = vector.load %arg21[%c0_67, %c18_68] : memref<16x128xf32, #tpu.memory_space<vmem>>, vector<16x110xf32>
    tpu.vector_store %arg21[%c0_67, %c18_68], %178 {strides = array<i32>} : memref<16x128xf32, #tpu.memory_space<vmem>>, vector<16x110xf32>,
    %c0_69 = arith.constant 0 : index
    %c0_70 = arith.constant 0 : index
    %180 = vector.load %arg21[%c0_69, %c0_70] : memref<16x128xf32, #tpu.memory_space<vmem>>, vector<16x128xf32>
    %181 = vector.extract_strided_slice %174 {offsets = [0, 0], sizes = [16, 1], strides = [1, 1]} : vector<16x5xf32> to vector<16x1xf32>
    %182 = vector.extract_strided_slice %180 {offsets = [0, 0], sizes = [16, 16], strides = [1, 1]} : vector<16x128xf32> to vector<16x16xf32>
    %183 = vector.broadcast %181 : vector<16x1xf32> to vector<16x16xf32>
    %184 = arith.mulf %183, %182 : vector<16x16xf32>
    %185 = vector.extract_strided_slice %174 {offsets = [0, 1], sizes = [16, 1], strides = [1, 1]} : vector<16x5xf32> to vector<16x1xf32>
    %186 = vector.extract_strided_slice %180 {offsets = [0, 1], sizes = [16, 16], strides = [1, 1]} : vector<16x128xf32> to vector<16x16xf32>
    %187 = vector.broadcast %185 : vector<16x1xf32> to vector<16x16xf32>
    %188 = arith.mulf %187, %186 : vector<16x16xf32>
    %189 = vector.extract_strided_slice %174 {offsets = [0, 2], sizes = [16, 1], strides = [1, 1]} : vector<16x5xf32> to vector<16x1xf32>
    %190 = vector.extract_strided_slice %180 {offsets = [0, 2], sizes = [16, 16], strides = [1, 1]} : vector<16x128xf32> to vector<16x16xf32>
    %191 = vector.broadcast %189 : vector<16x1xf32> to vector<16x16xf32>
    %192 = arith.mulf %191, %190 : vector<16x16xf32>
    %193 = vector.extract_strided_slice %174 {offsets = [0, 3], sizes = [16, 1], strides = [1, 1]} : vector<16x5xf32> to vector<16x1xf32>
    %194 = vector.extract_strided_slice %180 {offsets = [0, 3], sizes = [16, 16], strides = [1, 1]} : vector<16x128xf32> to vector<16x16xf32>
    %195 = vector.broadcast %193 : vector<16x1xf32> to vector<16x16xf32>
    %196 = arith.mulf %195, %194 : vector<16x16xf32>
    %197 = vector.extract_strided_slice %174 {offsets = [0, 4], sizes = [16, 1], strides = [1, 1]} : vector<16x5xf32> to vector<16x1xf32>
    %198 = vector.extract_strided_slice %180 {offsets = [0, 4], sizes = [16, 16], strides = [1, 1]} : vector<16x128xf32> to vector<16x16xf32>
    %199 = vector.broadcast %197 : vector<16x1xf32> to vector<16x16xf32>
    %200 = arith.mulf %199, %198 : vector<16x16xf32>
    %201 = arith.addf %184, %192 : vector<16x16xf32>
    %202 = arith.addf %188, %196 : vector<16x16xf32>
    %203 = arith.addf %201, %200 : vector<16x16xf32>
    %204 = arith.addf %203, %202 : vector<16x16xf32>
    %205 = vector.extract_strided_slice %173 {offsets = [0, 0], sizes = [16, 1], strides = [1, 1]} : vector<16x3xf32> to vector<16x1xf32>
    %206 = vector.broadcast %205 : vector<16x1xf32> to vector<16x16xf32>
    %207 = arith.addf %204, %206 : vector<16x16xf32>
    %cst_71 = arith.constant 2.000000e+01 : f32
    %208 = vector.broadcast %cst_71 : f32 to vector<16x16xf32>
    %209 = arith.minimumf %207, %208 : vector<16x16xf32>
    %210 = math.exp %209 : vector<16x16xf32>
    %cst_72 = arith.constant 2.000000e+00 : f32
    %211 = vector.broadcast %cst_72 : f32 to vector<16x16xf32>
    %212 = arith.addf %210, %211 : vector<16x16xf32>
    %213 = arith.mulf %210, %212 : vector<16x16xf32>
    %214 = arith.mulf %207, %213 : vector<16x16xf32>
    %cst_73 = arith.constant 2.000000e+00 : f32
    %215 = vector.broadcast %cst_73 : f32 to vector<16x16xf32>
    %216 = arith.addf %213, %215 : vector<16x16xf32>
    %217 = tpu.reciprocal %216 {approx = true} : vector<16x16xf32> -> vector<16x16xf32>
    %218 = arith.mulf %214, %217 : vector<16x16xf32>
    %cst_74 = arith.constant 2.000000e+01 : f32
    %219 = vector.broadcast %cst_74 : f32 to vector<16x16xf32>
    %220 = arith.cmpf ogt, %207, %219 : vector<16x16xf32>
    %221 = arith.select %220, %207, %218 : vector<16x16xi1>, vector<16x16xf32>
    %cst_75 = arith.constant dense<0.000000e+00> : vector<16xf32>
    %222 = vector.multi_reduction <add>, %221, %cst_75 [1] : vector<16x16xf32> to vector<16xf32>
    %223 = vector.shape_cast %222 : vector<16xf32> to vector<16x1xf32>
    %cst_76 = arith.constant 1.600000e+01 : f32
    %224 = vector.broadcast %cst_76 : f32 to vector<16x1xf32>
    %225 = arith.divf %223, %224 : vector<16x1xf32>
    %c0_77 = arith.constant 0 : index
    %c0_78 = arith.constant 0 : index
    %226 = vector.load %arg12[%c0_77, %c0_78] : memref<16x4xf32, #tpu.memory_space<vmem>>, vector<16x4xf32>
    %227 = vector.broadcast %225 : vector<16x1xf32> to vector<16x4xf32>
    %228 = arith.mulf %226, %227 : vector<16x4xf32>
    %cst_79 = arith.constant dense<0.000000e+00> : vector<4xf32>
    %229 = vector.multi_reduction <add>, %228, %cst_79 [0] : vector<16x4xf32> to vector<4xf32>
    %230 = vector.shape_cast %229 : vector<4xf32> to vector<1x4xf32>
    %c0_80 = arith.constant 0 : index
    %c0_81 = arith.constant 0 : index
    %231 = vector.load %arg13[%c0_80, %c0_81] : memref<1x4xf32, #tpu.memory_space<vmem>>, vector<1x4xf32>
    %232 = arith.addf %230, %231 : vector<1x4xf32>
    %cst_82 = arith.constant 2.000000e+01 : f32
    %233 = vector.broadcast %cst_82 : f32 to vector<1x4xf32>
    %234 = arith.minimumf %232, %233 : vector<1x4xf32>
    %235 = math.exp %234 : vector<1x4xf32>
    %cst_83 = arith.constant 2.000000e+00 : f32
    %236 = vector.broadcast %cst_83 : f32 to vector<1x4xf32>
    %237 = arith.addf %235, %236 : vector<1x4xf32>
    %238 = arith.mulf %235, %237 : vector<1x4xf32>
    %239 = arith.mulf %232, %238 : vector<1x4xf32>
    %cst_84 = arith.constant 2.000000e+00 : f32
    %240 = vector.broadcast %cst_84 : f32 to vector<1x4xf32>
    %241 = arith.addf %238, %240 : vector<1x4xf32>
    %242 = tpu.reciprocal %241 {approx = true} : vector<1x4xf32> -> vector<1x4xf32>
    %243 = arith.mulf %239, %242 : vector<1x4xf32>
    %cst_85 = arith.constant 2.000000e+01 : f32
    %244 = vector.broadcast %cst_85 : f32 to vector<1x4xf32>
    %245 = arith.cmpf ogt, %232, %244 : vector<1x4xf32>
    %246 = arith.select %245, %232, %243 : vector<1x4xi1>, vector<1x4xf32>
    %c0_86 = arith.constant 0 : index
    %c0_87 = arith.constant 0 : index
    %247 = vector.load %arg14[%c0_86, %c0_87] : memref<16x4xf32, #tpu.memory_space<vmem>>, vector<16x4xf32>
    %248 = vector.broadcast %246 : vector<1x4xf32> to vector<16x4xf32>
    %249 = arith.mulf %247, %248 : vector<16x4xf32>
    %cst_88 = arith.constant dense<0.000000e+00> : vector<16xf32>
    %250 = vector.multi_reduction <add>, %249, %cst_88 [1] : vector<16x4xf32> to vector<16xf32>
    %251 = vector.shape_cast %250 : vector<16xf32> to vector<16x1xf32>
    %252 = vector.extract_strided_slice %173 {offsets = [0, 1], sizes = [16, 1], strides = [1, 1]} : vector<16x3xf32> to vector<16x1xf32>
    %253 = arith.addf %251, %252 : vector<16x1xf32>
    %254 = math.absf %253 : vector<16x1xf32>
    %cst_89 = arith.constant 0.000000e+00 : f32
    %255 = vector.broadcast %cst_89 : f32 to vector<16x1xf32>
    %256 = arith.subf %255, %254 : vector<16x1xf32>
    %257 = math.exp %256 : vector<16x1xf32>
    %cst_90 = arith.constant 1.000000e+00 : f32
    %258 = vector.broadcast %cst_90 : f32 to vector<16x1xf32>
    %259 = arith.addf %258, %257 : vector<16x1xf32>
    %260 = tpu.reciprocal %259 {approx = true} : vector<16x1xf32> -> vector<16x1xf32>
    %cst_91 = arith.constant 0.000000e+00 : f32
    %261 = vector.broadcast %cst_91 : f32 to vector<16x1xf32>
    %262 = arith.cmpf oge, %253, %261 : vector<16x1xf32>
    %263 = arith.mulf %257, %260 : vector<16x1xf32>
    %264 = arith.select %262, %260, %263 : vector<16x1xi1>, vector<16x1xf32>
    %265 = vector.broadcast %264 : vector<16x1xf32> to vector<16x16xf32>
    %266 = arith.mulf %221, %265 : vector<16x16xf32>
    %c0_92 = arith.constant 0 : index
    %c0_93 = arith.constant 0 : index
    %267 = vector.load %arg15[%c0_92, %c0_93] : memref<16x16xbf16, #tpu.memory_space<vmem>>, vector<16x16xbf16>
    %268 = arith.truncf %266 : vector<16x16xf32> to vector<16x16xbf16>
    %cst_94 = arith.constant dense<0.000000e+00> : vector<16x16xf32>
    %269 = tpu.matmul %267, %268, %cst_94 {dimension_numbers = #tpu.dot_dimension_numbers<[1], [0], [0], [1], [0, 0, 1, 1], [], []>} : vector<16x16xbf16>, vector<16x16xbf16>, vector<16x16xf32> -> vector<16x16xf32>
    %270 = vector.extract_strided_slice %173 {offsets = [0, 2], sizes = [16, 1], strides = [1, 1]} : vector<16x3xf32> to vector<16x1xf32>
    %271 = vector.broadcast %270 : vector<16x1xf32> to vector<16x16xf32>
    %272 = arith.addf %269, %271 : vector<16x16xf32>
    %cst_95 = arith.constant 2.000000e+01 : f32
    %273 = vector.broadcast %cst_95 : f32 to vector<16x16xf32>
    %274 = arith.minimumf %272, %273 : vector<16x16xf32>
    %275 = math.exp %274 : vector<16x16xf32>
    %cst_96 = arith.constant 2.000000e+00 : f32
    %276 = vector.broadcast %cst_96 : f32 to vector<16x16xf32>
    %277 = arith.addf %275, %276 : vector<16x16xf32>
    %278 = arith.mulf %275, %277 : vector<16x16xf32>
    %279 = arith.mulf %272, %278 : vector<16x16xf32>
    %cst_97 = arith.constant 2.000000e+00 : f32
    %280 = vector.broadcast %cst_97 : f32 to vector<16x16xf32>
    %281 = arith.addf %278, %280 : vector<16x16xf32>
    %282 = tpu.reciprocal %281 {approx = true} : vector<16x16xf32> -> vector<16x16xf32>
    %283 = arith.mulf %279, %282 : vector<16x16xf32>
    %cst_98 = arith.constant 2.000000e+01 : f32
    %284 = vector.broadcast %cst_98 : f32 to vector<16x16xf32>
    %285 = arith.cmpf ogt, %272, %284 : vector<16x16xf32>
    %286 = arith.select %285, %272, %283 : vector<16x16xi1>, vector<16x16xf32>
    %c0_99 = arith.constant 0 : index
    %c0_100 = arith.constant 0 : index
    %287 = memref.load %arg17[%c0_99, %c0_100] : memref<1x1xf32, #tpu.memory_space<smem>>
    %288 = vector.broadcast %287 : f32 to vector<16x16xf32>
    %289 = arith.mulf %288, %286 : vector<16x16xf32>
    %290 = arith.addf %172, %289 : vector<16x16xf32>
    %c0_101 = arith.constant 0 : index
    %c0_102 = arith.constant 0 : index
    %291 = vector.load %arg18[%c0_101, %c0_102] : memref<8x16xbf16, #tpu.memory_space<vmem>>, vector<8x16xbf16>
    %292 = arith.truncf %290 : vector<16x16xf32> to vector<16x16xbf16>
    %cst_103 = arith.constant dense<0.000000e+00> : vector<8x16xf32>
    %293 = tpu.matmul %291, %292, %cst_103 {dimension_numbers = #tpu.dot_dimension_numbers<[1], [0], [0], [1], [0, 0, 1, 1], [], []>} : vector<8x16xbf16>, vector<16x16xbf16>, vector<8x16xf32> -> vector<8x16xf32>
    %c0_104 = arith.constant 0 : index
    %c0_105 = arith.constant 0 : index
    %294 = vector.load %arg19[%c0_104, %c0_105] : memref<8x1xf32, #tpu.memory_space<vmem>>, vector<8x1xf32>
    %295 = vector.broadcast %294 : vector<8x1xf32> to vector<8x16xf32>
    %296 = arith.addf %293, %295 : vector<8x16xf32>
    %cst_106 = arith.constant dense<0xFF800000> : vector<16xf32>
    %297 = vector.multi_reduction <maximumf>, %296, %cst_106 [0] : vector<8x16xf32> to vector<16xf32>
    %298 = vector.shape_cast %297 : vector<16xf32> to vector<1x16xf32>
    %299 = vector.broadcast %298 : vector<1x16xf32> to vector<8x16xf32>
    %300 = arith.subf %296, %299 : vector<8x16xf32>
    %301 = math.exp %300 : vector<8x16xf32>
    %cst_107 = arith.constant dense<0.000000e+00> : vector<16xf32>
    %302 = vector.multi_reduction <add>, %301, %cst_107 [0] : vector<8x16xf32> to vector<16xf32>
    %303 = vector.shape_cast %302 : vector<16xf32> to vector<1x16xf32>
    %304 = math.log %303 : vector<1x16xf32>
    %305 = vector.broadcast %304 : vector<1x16xf32> to vector<8x16xf32>
    %306 = arith.subf %300, %305 : vector<8x16xf32>
    %c0_108 = arith.constant 0 : index
    %c0_109 = arith.constant 0 : index
    %c0_110 = arith.constant 0 : index
    %307 = vector.load %arg20[%c0_108, %c0_109, %c0_110] : memref<1x8x16xf32, #tpu.memory_space<vmem>>, vector<1x8x16xf32>
    %308 = vector.shape_cast %307 : vector<1x8x16xf32> to vector<8x16xf32>
    %309 = vector.shape_cast %306 : vector<8x16xf32> to vector<1x8x16xf32>
    tpu.vector_store %arg20[%c0_108, %c0_109, %c0_110], %309 {strides = array<i32>} : memref<1x8x16xf32, #tpu.memory_space<vmem>>, vector<1x8x16xf32>,
    return
  }
  func.func @transform_0(%arg0: i32) -> (i32, i32, i32) {
    %c0_i32 = arith.constant 0 : i32
    %c0_i32_0 = arith.constant 0 : i32
    %c0_i32_1 = arith.constant 0 : i32
    return %arg0, %c0_i32, %c0_i32_0 : i32, i32, i32
  }
  func.func @transform_1(%arg0: i32) -> (i32, i32) {
    %c0_i32 = arith.constant 0 : i32
    %c0_i32_0 = arith.constant 0 : i32
    %c0_i32_1 = arith.constant 0 : i32
    return %c0_i32, %c0_i32_0 : i32, i32
  }
  func.func @transform_2(%arg0: i32) -> (i32, i32) {
    %c0_i32 = arith.constant 0 : i32
    %c0_i32_0 = arith.constant 0 : i32
    %c0_i32_1 = arith.constant 0 : i32
    return %c0_i32, %c0_i32_0 : i32, i32
  }
  func.func @transform_3(%arg0: i32) -> (i32, i32) {
    %c0_i32 = arith.constant 0 : i32
    %c0_i32_0 = arith.constant 0 : i32
    %c0_i32_1 = arith.constant 0 : i32
    return %c0_i32, %c0_i32_0 : i32, i32
  }
  func.func @transform_4(%arg0: i32) -> (i32, i32) {
    %c0_i32 = arith.constant 0 : i32
    %c0_i32_0 = arith.constant 0 : i32
    %c0_i32_1 = arith.constant 0 : i32
    return %c0_i32, %c0_i32_0 : i32, i32
  }
  func.func @transform_5(%arg0: i32) -> (i32, i32) {
    %c0_i32 = arith.constant 0 : i32
    %c0_i32_0 = arith.constant 0 : i32
    %c0_i32_1 = arith.constant 0 : i32
    return %c0_i32, %c0_i32_0 : i32, i32
  }
  func.func @transform_6(%arg0: i32) -> (i32, i32) {
    %c0_i32 = arith.constant 0 : i32
    %c0_i32_0 = arith.constant 0 : i32
    %c0_i32_1 = arith.constant 0 : i32
    return %c0_i32, %c0_i32_0 : i32, i32
  }
  func.func @transform_7(%arg0: i32) -> (i32, i32) {
    %c0_i32 = arith.constant 0 : i32
    %c0_i32_0 = arith.constant 0 : i32
    %c0_i32_1 = arith.constant 0 : i32
    return %c0_i32, %c0_i32_0 : i32, i32
  }
  func.func @transform_8(%arg0: i32) -> (i32, i32) {
    %c0_i32 = arith.constant 0 : i32
    %c0_i32_0 = arith.constant 0 : i32
    %c0_i32_1 = arith.constant 0 : i32
    return %c0_i32, %c0_i32_0 : i32, i32
  }
  func.func @transform_9(%arg0: i32) -> (i32, i32) {
    %c0_i32 = arith.constant 0 : i32
    %c0_i32_0 = arith.constant 0 : i32
    %c0_i32_1 = arith.constant 0 : i32
    return %c0_i32, %c0_i32_0 : i32, i32
  }
  func.func @transform_10(%arg0: i32) -> (i32, i32) {
    %c0_i32 = arith.constant 0 : i32
    %c0_i32_0 = arith.constant 0 : i32
    %c0_i32_1 = arith.constant 0 : i32
    return %c0_i32, %c0_i32_0 : i32, i32
  }
  func.func @transform_11(%arg0: i32) -> (i32, i32) {
    %c0_i32 = arith.constant 0 : i32
    %c0_i32_0 = arith.constant 0 : i32
    %c0_i32_1 = arith.constant 0 : i32
    return %c0_i32, %c0_i32_0 : i32, i32
  }
  func.func @transform_12(%arg0: i32) -> (i32, i32) {
    %c0_i32 = arith.constant 0 : i32
    %c0_i32_0 = arith.constant 0 : i32
    %c0_i32_1 = arith.constant 0 : i32
    return %c0_i32, %c0_i32_0 : i32, i32
  }
  func.func @transform_13(%arg0: i32) -> (i32, i32) {
    %c0_i32 = arith.constant 0 : i32
    %c0_i32_0 = arith.constant 0 : i32
    %c0_i32_1 = arith.constant 0 : i32
    return %c0_i32, %c0_i32_0 : i32, i32
  }
  func.func @transform_14(%arg0: i32) -> (i32, i32) {
    %c0_i32 = arith.constant 0 : i32
    %c0_i32_0 = arith.constant 0 : i32
    %c0_i32_1 = arith.constant 0 : i32
    return %c0_i32, %c0_i32_0 : i32, i32
  }
  func.func @transform_15(%arg0: i32) -> (i32, i32) {
    %c0_i32 = arith.constant 0 : i32
    %c0_i32_0 = arith.constant 0 : i32
    %c0_i32_1 = arith.constant 0 : i32
    return %c0_i32, %c0_i32_0 : i32, i32
  }
  func.func @transform_16(%arg0: i32) -> (i32, i32) {
    %c0_i32 = arith.constant 0 : i32
    %c0_i32_0 = arith.constant 0 : i32
    %c0_i32_1 = arith.constant 0 : i32
    return %c0_i32, %c0_i32_0 : i32, i32
  }
  func.func @transform_17(%arg0: i32) -> (i32, i32) {
    %c0_i32 = arith.constant 0 : i32
    %c0_i32_0 = arith.constant 0 : i32
    %c0_i32_1 = arith.constant 0 : i32
    return %c0_i32, %c0_i32_0 : i32, i32
  }
  func.func @transform_18(%arg0: i32) -> (i32, i32) {
    %c0_i32 = arith.constant 0 : i32
    %c0_i32_0 = arith.constant 0 : i32
    %c0_i32_1 = arith.constant 0 : i32
    return %c0_i32, %c0_i32_0 : i32, i32
  }
  func.func @transform_19(%arg0: i32) -> (i32, i32, i32) {
    %c0_i32 = arith.constant 0 : i32
    %c0_i32_0 = arith.constant 0 : i32
    %c0_i32_1 = arith.constant 0 : i32
    return %arg0, %c0_i32, %c0_i32_0 : i32, i32, i32
  }
}

</mosaic_0001>

<llo_original>
// kernel: tpu_custom_call.1
$region0: #{tpu_custom_call.1}
  #allocation0 [shape = 'u32[]', space=smem, size = 0x4, offset = 0x4, fixed_abs, tag = 'smem constant byte address 0x4 - core index']
  #allocation1 [shape = 'u32[144,128]{1,0:T(1,128)}', space=vmem, size = 0x12000, scoped, tag = 'internal scratch']
  %s0 = inlined_call_operand.hbm [shape: s32[8,128], index: 0, kind: input, shape index: {}]
  %s1 = inlined_call_operand.hbm [shape: s32[8,128], index: 1, kind: output, shape index: {}]
  %s2 = sld [smem:[#allocation0]]
  $region18: #{tpu_custom_call.1} parent=0
    _
  %s4 = ssub.s32 1, %s2
  %s5 = scalar_select 0, %s4, %s2
  $region1: #{tpu_custom_call.1} parent=0
    #allocation2 [shape = 'u8[4096]{0}', space=vmem, size = 0x1000, scoped, tag = 'input window, operand 0, single buffered']
    #allocation3 [shape = 's32[1]{0}', space=sflag, size = 0x4, scoped, tag = 'scoped memory for tpu_custom_call.1']
    #allocation4 [shape = 's32[1]{0}', space=sflag, size = 0x4, scoped, tag = 'scoped memory for tpu_custom_call.1']
    #allocation5 [shape = 'u8[4096]{0}', space=vmem, size = 0x1000, scoped, tag = 'output window, operand 0, single buffered']
    %6 = vsyncpa [#allocation3], 0
    %7 = vsyncpa [#allocation4], 0
    // Predicated region
    $region2: #{tpu_custom_call.1} parent=1 // pred_check
      _
    $region3: #{tpu_custom_call.1} parent=1 // pred_check_branch
      %9 = sbr.rel (0) target = $region5
    $region4: #{tpu_custom_call.1} parent=1 // pred_region
      %s11 = ssub.s32 128, 128
      %12 = vsyncadd [#allocation3], %s11
      %s14 = sshll.u32 [#allocation2], 4
      %s15 = int_to_ptr.vmem [resolvable:$true] %s14
      %17 = dma.hbm_to_vmem [thread:$0]  %s0, 128, %s15, [#allocation3]
    $region5: #{tpu_custom_call.1} parent=1 // pred_fallthru
      _
    // Predicated region
    $region6: #{tpu_custom_call.1} parent=1 // pred_check
      _
    $region7: #{tpu_custom_call.1} parent=1 // pred_check_branch
      %19 = sbr.rel (0) target = $region9
    $region8: #{tpu_custom_call.1} parent=1 // pred_region
      %20 = dma.done [#allocation3], 128
    $region9: #{tpu_custom_call.1} parent=1 // pred_fallthru
      _
    %v21 = vld [vmem:[#allocation2] sm:$0xff]
    %22 = vrot.lane.b32.xlu0 %v21, 1
    %v23 = vpop.permute.xlu0 %22
    %24 = vst [vmem:[#allocation5] sm:$0xff] %v23
    // Predicated region
    $region10: #{tpu_custom_call.1} parent=1 // pred_check
      _
    $region11: #{tpu_custom_call.1} parent=1 // pred_check_branch
      %26 = sbr.rel (0) target = $region13
    $region12: #{tpu_custom_call.1} parent=1 // pred_region
      %s28 = ssub.s32 128, 128
      %29 = vsyncadd [#allocation4], %s28
      %s31 = sshll.u32 [#allocation5], 4
      %s32 = int_to_ptr.vmem [resolvable:$true] %s31
      %34 = dma.vmem_to_hbm [thread:$0]  %s32, 128, %s1, [#allocation4]
    $region13: #{tpu_custom_call.1} parent=1 // pred_fallthru
      _
    // Predicated region
    $region14: #{tpu_custom_call.1} parent=1 // pred_check
      _
    $region15: #{tpu_custom_call.1} parent=1 // pred_check_branch
      %36 = sbr.rel (0) target = $region17
    $region16: #{tpu_custom_call.1} parent=1 // pred_region
      %37 = dma.done [#allocation4], 128
    $region17: #{tpu_custom_call.1} parent=1 // pred_fallthru
      _
    %38 = vsyncpa [#allocation3], 1
    %39 = vsyncpa [#allocation4], 1

// kernel: tpu_custom_call.1
$region0: #{tpu_custom_call.1}
  #allocation0 [shape = 'u32[]', space=smem, size = 0x4, offset = 0x4, fixed_abs, tag = 'smem constant byte address 0x4 - core index']
  #allocation1 [shape = 'u32[144,128]{1,0:T(1,128)}', space=vmem, size = 0x12000, scoped, tag = 'internal scratch']
  %s0 = inlined_call_operand.hbm [shape: f32[2,8,128], index: 0, kind: input, shape index: {}]
  %s1 = inlined_call_operand.hbm [shape: f32[8,128], index: 1, kind: input, shape index: {}]
  %s2 = inlined_call_operand.hbm [shape: f32[2,8,128], index: 2, kind: output, shape index: {}]
  %s3 = sld [smem:[#allocation0]]
  $region49: #{tpu_custom_call.1} parent=0
    _
  %s5 = ssub.s32 1, %s3
  %s6 = scalar_select 0, %s5, %s3
  $region1: #{tpu_custom_call.1} parent=0
    #allocation2 [shape = 'u8[8192]{0}', space=vmem, size = 0x2000, scoped, tag = 'input window, operand 0']
    #allocation3 [shape = 's32[2]{0}', space=sflag, size = 0x8, scoped, tag = 'scoped memory for tpu_custom_call.1']
    #allocation4 [shape = 's32[2]{0}', space=sflag, size = 0x8, scoped, tag = 'scoped memory for tpu_custom_call.1']
    #allocation5 [shape = 'u8[4096]{0}', space=vmem, size = 0x1000, scoped, tag = 'input window, operand 1, single buffered']
    #allocation6 [shape = 's32[1]{0}', space=sflag, size = 0x4, scoped, tag = 'scoped memory for tpu_custom_call.1']
    #allocation7 [shape = 'u8[8192]{0}', space=vmem, size = 0x2000, scoped, tag = 'output window, operand 0']
    %7 = vsyncpa [#allocation3], 0
    %s8 = scalar_lea.sflag [#allocation3], 1
    %9 = vsyncpa %s8, 0
    %10 = vsyncpa [#allocation6], 0
    %11 = vsyncpa [#allocation4], 0
    %s12 = scalar_lea.sflag [#allocation4], 1
    %13 = vsyncpa %s12, 0
    loop: start=0, step=1, limit=4
    $region2: #{tpu_custom_call.1} parent=1 // loop_pre_header
      _
    $region3: #{tpu_custom_call.1} parent=1 // loop_header
      %s15 = sphi 0, %s19
      %p16 = scmp.ge.s32.totalorder %s15, 4
      %s25 = sphi 0, %s27
      %s28 = sphi 0, %s25
      %s29 = sphi 0, %s28
      %s45 = sphi 0, %s29
      %s49 = sphi 0, %s49
      %s51 = sphi 0, %s49
      %s52 = sphi 0, %s51
      %s66 = sphi 0, %s52
      %s72 = sphi 0, %s74
      %s75 = sphi 0, %s72
      %s76 = sphi 0, %s75
      %s92 = sphi 0, %s76
    $region4: #{tpu_custom_call.1} parent=1 // loop_header_branch
      %18 = sbr.rel (%p16) target = $region8
    $region5: #{tpu_custom_call.1} parent=1 // loop_body
      %s20 = ssub.s32 %s15, 1
      %s21 = ssub.s32 %s15, 2
      %s22 = sadd.s32 %s15, 1
      %s23 = ssub.s32 %s15, %s22
      %p24 = scmp.eq.s32.totalorder %s23, 0
      %s26 = sadd.s32 %s25, 1
      %s27 = scalar_select %p24, %s25, %s26
      %p30 = pneg %p24
      %p31 = scmp.eq.s32.totalorder %s15, 1
      %p32 = por %p30, %p31
      %p33 = scmp.ne.s32.totalorder %s25, %s28
      %p34 = scmp.eq.s32.totalorder %s15, 0
      %p35 = por %p33, %p34
      %p36 = scmp.ne.s32.totalorder %s25, %s28
      %p37 = scmp.eq.s32.totalorder %s20, 1
      %p38 = por %p36, %p37
      %p39 = scmp.ne.s32.totalorder %s28, %s29
      %p40 = scmp.eq.s32.totalorder %s20, 0
      %p41 = por %p39, %p40
      %p42 = scmp.ne.s32.totalorder %s28, %s29
      %p43 = scmp.eq.s32.totalorder %s21, 1
      %p44 = por %p42, %p43
      %p46 = scmp.ne.s32.totalorder %s29, %s45
      %p47 = scmp.eq.s32.totalorder %s21, 0
      %p48 = por %p46, %p47
      %s50 = sadd.s32 %s49, 1
      %p53 = scmp.eq.s32.totalorder %s15, 1
      %p54 = scmp.ne.s32.totalorder %s49, %s51
      %p55 = scmp.eq.s32.totalorder %s15, 0
      %p56 = por %p54, %p55
      %p57 = scmp.ne.s32.totalorder %s49, %s51
      %p58 = scmp.eq.s32.totalorder %s20, 1
      %p59 = por %p57, %p58
      %p60 = scmp.ne.s32.totalorder %s51, %s52
      %p61 = scmp.eq.s32.totalorder %s20, 0
      %p62 = por %p60, %p61
      %p63 = scmp.ne.s32.totalorder %s51, %s52
      %p64 = scmp.eq.s32.totalorder %s21, 1
      %p65 = por %p63, %p64
      %p67 = scmp.ne.s32.totalorder %s52, %s66
      %p68 = scmp.eq.s32.totalorder %s21, 0
      %p69 = por %p67, %p68
      %s70 = ssub.s32 %s15, %s22
      %p71 = scmp.eq.s32.totalorder %s70, 0
      %s73 = sadd.s32 %s72, 1
      %s74 = scalar_select %p71, %s72, %s73
      %p77 = pneg %p71
      %p78 = scmp.eq.s32.totalorder %s15, 1
      %p79 = por %p77, %p78
      %p80 = scmp.ne.s32.totalorder %s72, %s75
      %p81 = scmp.eq.s32.totalorder %s15, 0
      %p82 = por %p80, %p81
      %p83 = scmp.ne.s32.totalorder %s72, %s75
      %p84 = scmp.eq.s32.totalorder %s20, 1
      %p85 = por %p83, %p84
      %p86 = scmp.ne.s32.totalorder %s75, %s76
      %p87 = scmp.eq.s32.totalorder %s20, 0
      %p88 = por %p86, %p87
      %p89 = scmp.ne.s32.totalorder %s75, %s76
      %p90 = scmp.eq.s32.totalorder %s21, 1
      %p91 = por %p89, %p90
      %p93 = scmp.ne.s32.totalorder %s76, %s92
      %p94 = scmp.eq.s32.totalorder %s21, 0
      %p95 = por %p93, %p94
      %p96 = scmp.le.s32.totalorder 1, %s15
      %p97 = scmp.lt.s32.totalorder %s15, 3
      %p98 = pnand %p96, %p97
      %p99 = pneg %p98
      // Predicated region
      $region9: #{tpu_custom_call.1} parent=5 // pred_check
        _
      $region10: #{tpu_custom_call.1} parent=5 // pred_check_branch
        %101 = sbr.rel (%p98) target = $region12
      $region11: #{tpu_custom_call.1} parent=5 // pred_region
        %s102 = ssub.s32 %s15, 1
        // Predicated region
        $region13: #{tpu_custom_call.1} parent=11 // pred_check
          %p103 = pneg %p62
        $region14: #{tpu_custom_call.1} parent=11 // pred_check_branch
          %105 = sbr.rel (%p103) target = $region16
        $region15: #{tpu_custom_call.1} parent=11 // pred_region
          %s107 = ssub.s32 128, 128
          %108 = vsyncadd [#allocation6], %s107
          %s110 = sshll.u32 [#allocation5], 4
          %s111 = int_to_ptr.vmem [resolvable:$true] %s110
          %113 = dma.hbm_to_vmem [thread:$0]  %s1, 128, %s111, [#allocation6]
        $region16: #{tpu_custom_call.1} parent=11 // pred_fallthru
          _
      $region12: #{tpu_custom_call.1} parent=5 // pred_fallthru
        _
      %p114 = scmp.lt.s32.totalorder %s15, 2
      // Predicated region
      $region17: #{tpu_custom_call.1} parent=5 // pred_check
        %p115 = pneg %p114
      $region18: #{tpu_custom_call.1} parent=5 // pred_check_branch
        %117 = sbr.rel (%p115) target = $region20
      $region19: #{tpu_custom_call.1} parent=5 // pred_region
        // Predicated region
        $region21: #{tpu_custom_call.1} parent=19 // pred_check
          %p118 = pneg %p35
        $region22: #{tpu_custom_call.1} parent=19 // pred_check_branch
          %120 = sbr.rel (%p118) target = $region24
        $region23: #{tpu_custom_call.1} parent=19 // pred_region
          %s121 = sand.u32 %s25, 1
          %s122 = scalar_lea.sflag [#allocation3], %s121
          %s123 = sand.u32 %s25, 1
          %s124 = smul.addr %s123, 8
          %s125 = scalar_lea.vmem [#allocation2], %s124
          %s127 = ssub.s32 128, 128
          %128 = vsyncadd %s122, %s127
          %s129 = smul.addr %s15, 128
          %s130 = scalar_lea.hbm %s0, %s129
          %s132 = sshll.u32 %s125, 4
          %s133 = int_to_ptr.vmem [resolvable:$true] %s132
          %135 = dma.hbm_to_vmem [thread:$0]  %s130, 128, %s133, %s122
        $region24: #{tpu_custom_call.1} parent=19 // pred_fallthru
          _
      $region20: #{tpu_custom_call.1} parent=5 // pred_fallthru
        _
      %p136 = scmp.le.s32.totalorder 1, %s15
      %p137 = scmp.lt.s32.totalorder %s15, 3
      %p138 = pnand %p136, %p137
      %p139 = pneg %p138
      // Predicated region
      $region25: #{tpu_custom_call.1} parent=5 // pred_check
        _
      $region26: #{tpu_custom_call.1} parent=5 // pred_check_branch
        %141 = sbr.rel (%p138) target = $region28
      $region27: #{tpu_custom_call.1} parent=5 // pred_region
        %s142 = ssub.s32 %s15, 1
        %s143 = sand.u32 %s28, 1
        %s144 = scalar_lea.sflag [#allocation3], %s143
        %s145 = sand.u32 %s28, 1
        %s146 = smul.addr %s145, 8
        %s147 = scalar_lea.vmem [#allocation2], %s146
        // Predicated region
        $region29: #{tpu_custom_call.1} parent=27 // pred_check
          %p148 = pneg %p41
        $region30: #{tpu_custom_call.1} parent=27 // pred_check_branch
          %150 = sbr.rel (%p148) target = $region32
        $region31: #{tpu_custom_call.1} parent=27 // pred_region
          %151 = dma.done %s144, 128
        $region32: #{tpu_custom_call.1} parent=27 // pred_fallthru
          _
        // Predicated region
        $region33: #{tpu_custom_call.1} parent=27 // pred_check
          %p152 = pneg %p62
        $region34: #{tpu_custom_call.1} parent=27 // pred_check_branch
          %154 = sbr.rel (%p152) target = $region36
        $region35: #{tpu_custom_call.1} parent=27 // pred_region
          %155 = dma.done [#allocation6], 128
        $region36: #{tpu_custom_call.1} parent=27 // pred_fallthru
          _
        %s156 = sand.u32 %s28, 1
        %s157 = scalar_lea.sflag [#allocation3], %s156
        %s158 = sand.u32 %s28, 1
        %s159 = smul.addr %s158, 8
        %s160 = scalar_lea.vmem [#allocation2], %s159
        %p161 = pneg %p41
        %p162 = pneg %p38
        %p163 = pneg %p62
        %p164 = pneg %p59
        %p165 = pneg %p88
        %p166 = pneg %p85
        %s167 = sand.u32 %s75, 1
        %s168 = scalar_lea.sflag [#allocation4], %s167
        %s169 = sand.u32 %s75, 1
        %s170 = smul.addr %s169, 8
        %s171 = scalar_lea.vmem [#allocation7], %s170
        %v172 = vld [vmem:[%s147] sm:$0xff]
        %v173 = vld [vmem:[#allocation5] sm:$0xff]
        %v174 = vadd.f32 %v172, %v173
        %175 = vst [vmem:[%s171] sm:$0xff] %v174
        %s176 = sand.u32 %s75, 1
        %s177 = scalar_lea.sflag [#allocation4], %s176
        %s178 = sand.u32 %s75, 1
        %s179 = smul.addr %s178, 8
        %s180 = scalar_lea.vmem [#allocation7], %s179
        // Predicated region
        $region37: #{tpu_custom_call.1} parent=27 // pred_check
          %p181 = pneg %p85
        $region38: #{tpu_custom_call.1} parent=27 // pred_check_branch
          %183 = sbr.rel (%p181) target = $region40
        $region39: #{tpu_custom_call.1} parent=27 // pred_region
          %s185 = ssub.s32 128, 128
          %186 = vsyncadd %s177, %s185
          %s187 = smul.addr %s20, 128
          %s188 = scalar_lea.hbm %s2, %s187
          %s190 = sshll.u32 %s180, 4
          %s191 = int_to_ptr.vmem [resolvable:$true] %s190
          %193 = dma.vmem_to_hbm [thread:$0]  %s191, 128, %s188, %s177
        $region40: #{tpu_custom_call.1} parent=27 // pred_fallthru
          _
      $region28: #{tpu_custom_call.1} parent=5 // pred_fallthru
        _
      %p194 = scmp.le.s32.totalorder 2, %s15
      // Predicated region
      $region41: #{tpu_custom_call.1} parent=5 // pred_check
        %p195 = pneg %p194
      $region42: #{tpu_custom_call.1} parent=5 // pred_check_branch
        %197 = sbr.rel (%p195) target = $region44
      $region43: #{tpu_custom_call.1} parent=5 // pred_region
        %s198 = ssub.s32 %s15, 2
        // Predicated region
        $region45: #{tpu_custom_call.1} parent=43 // pred_check
          %p199 = pneg %p91
        $region46: #{tpu_custom_call.1} parent=43 // pred_check_branch
          %201 = sbr.rel (%p199) target = $region48
        $region47: #{tpu_custom_call.1} parent=43 // pred_region
          %s202 = sand.u32 %s76, 1
          %s203 = scalar_lea.sflag [#allocation4], %s202
          %s204 = sand.u32 %s76, 1
          %s205 = smul.addr %s204, 8
          %s206 = scalar_lea.vmem [#allocation7], %s205
          %207 = dma.done %s203, 128
        $region48: #{tpu_custom_call.1} parent=43 // pred_fallthru
          _
      $region44: #{tpu_custom_call.1} parent=5 // pred_fallthru
        _
    $region6: #{tpu_custom_call.1} parent=1 // loop_footer
      %s19 = sadd.s32 1, %s15
    $region7: #{tpu_custom_call.1} parent=1 // loop_footer_branch
      %14 = sbr.rel target = $region3
    $region8: #{tpu_custom_call.1} parent=1 // loop_exit
      _
    %208 = vsyncpa [#allocation3], 1
    %s209 = scalar_lea.sflag [#allocation3], 1
    %210 = vsyncpa %s209, 1
    %211 = vsyncpa [#allocation6], 1
    %212 = vsyncpa [#allocation4], 1
    %s213 = scalar_lea.sflag [#allocation4], 1
    %214 = vsyncpa %s213, 1

// kernel: tpu_custom_call.1
$region0: #{tpu_custom_call.1}
  #allocation0 [shape = 'u32[]', space=smem, size = 0x4, offset = 0x4, fixed_abs, tag = 'smem constant byte address 0x4 - core index']
  #allocation1 [shape = 'u32[144,128]{1,0:T(1,128)}', space=vmem, size = 0x12000, scoped, tag = 'internal scratch']
  #allocation2 [shape = 'f32[16,128]{1,0:T(8,128)}', space=vmem, size = 0x2000, scoped, tag = 'scratch operand']
  #allocation3 [shape = 'f32[1,1]{1,0:T(1,128)S(6)}', space=smem, size = 0x200, scoped, tag = 'scoped memory for tpu_custom_call.1']
  %s0 = inlined_call_operand.vmem [shape: f32[2,1,16], index: 0, kind: input, shape index: {}]
  %s1 = inlined_call_operand.vmem [shape: f32[8,3], index: 1, kind: input, shape index: {}]
  %s2 = inlined_call_operand.vmem [shape: f32[8,1], index: 2, kind: input, shape index: {}]
  %s3 = inlined_call_operand.vmem [shape: bf16[16,8], index: 3, kind: input, shape index: {}]
  %s4 = inlined_call_operand.vmem [shape: f32[16,5], index: 4, kind: input, shape index: {}]
  %s5 = inlined_call_operand.vmem [shape: f32[16,4], index: 5, kind: input, shape index: {}]
  %s6 = inlined_call_operand.vmem [shape: f32[1,4], index: 6, kind: input, shape index: {}]
  %s7 = inlined_call_operand.vmem [shape: f32[16,4], index: 7, kind: input, shape index: {}]
  %s8 = inlined_call_operand.vmem [shape: bf16[16,16], index: 8, kind: input, shape index: {}]
  %s9 = inlined_call_operand.vmem [shape: f32[16,4], index: 9, kind: input, shape index: {}]
  %s10 = inlined_call_operand.vmem [shape: f32[16,5], index: 10, kind: input, shape index: {}]
  %s11 = inlined_call_operand.vmem [shape: f32[16,4], index: 11, kind: input, shape index: {}]
  %s12 = inlined_call_operand.vmem [shape: f32[1,4], index: 12, kind: input, shape index: {}]
  %s13 = inlined_call_operand.vmem [shape: f32[16,4], index: 13, kind: input, shape index: {}]
  %s14 = inlined_call_operand.vmem [shape: bf16[16,16], index: 14, kind: input, shape index: {}]
  %s15 = inlined_call_operand.vmem [shape: f32[16,3], index: 15, kind: input, shape index: {}]
  %s16 = inlined_call_operand.<no memory space> [shape: f32[1,1], index: 16, kind: input, shape index: {}]
  %s17 = inlined_call_operand.vmem [shape: bf16[8,16], index: 17, kind: input, shape index: {}]
  %s18 = inlined_call_operand.vmem [shape: f32[8,1], index: 18, kind: input, shape index: {}]
  %s19 = inlined_call_operand.hbm [shape: f32[2,8,16], index: 19, kind: output, shape index: {}]
  %s20 = sld [smem:[#allocation0]]
  $region109: #{tpu_custom_call.1} parent=0
    _
  %s22 = ssub.s32 1, %s20
  %s23 = scalar_select 0, %s22, %s20
  %24 = sst [smem:[#allocation3]] %s16
  $region1: #{tpu_custom_call.1} parent=0
    #allocation4 [shape = 'u8[8192]{0}', space=vmem, size = 0x2000, scoped, tag = 'output window, operand 0']
    #allocation5 [shape = 's32[2]{0}', space=sflag, size = 0x8, scoped, tag = 'scoped memory for tpu_custom_call.1']
    %25 = vsyncpa [#allocation5], 0
    %s26 = scalar_lea.sflag [#allocation5], 1
    %27 = vsyncpa %s26, 0
    loop: start=0, step=1, limit=4
    $region2: #{tpu_custom_call.1} parent=1 // loop_pre_header
      _
    $region3: #{tpu_custom_call.1} parent=1 // loop_header
      %s29 = sphi 0, %s33
      %p30 = scmp.ge.s32.totalorder %s29, 4
      %s39 = sphi 0, %s41
      %s42 = sphi 0, %s39
      %s43 = sphi 0, %s42
      %s59 = sphi 0, %s43
      %s63 = sphi 0, %s63
      %s65 = sphi 0, %s63
      %s66 = sphi 0, %s65
      %s80 = sphi 0, %s66
      %s84 = sphi 0, %s84
      %s86 = sphi 0, %s84
      %s87 = sphi 0, %s86
      %s101 = sphi 0, %s87
      %s105 = sphi 0, %s105
      %s107 = sphi 0, %s105
      %s108 = sphi 0, %s107
      %s122 = sphi 0, %s108
      %s126 = sphi 0, %s126
      %s128 = sphi 0, %s126
      %s129 = sphi 0, %s128
      %s143 = sphi 0, %s129
      %s147 = sphi 0, %s147
      %s149 = sphi 0, %s147
      %s150 = sphi 0, %s149
      %s164 = sphi 0, %s150
      %s168 = sphi 0, %s168
      %s170 = sphi 0, %s168
      %s171 = sphi 0, %s170
      %s185 = sphi 0, %s171
      %s189 = sphi 0, %s189
      %s191 = sphi 0, %s189
      %s192 = sphi 0, %s191
      %s206 = sphi 0, %s192
      %s210 = sphi 0, %s210
      %s212 = sphi 0, %s210
      %s213 = sphi 0, %s212
      %s227 = sphi 0, %s213
      %s231 = sphi 0, %s231
      %s233 = sphi 0, %s231
      %s234 = sphi 0, %s233
      %s248 = sphi 0, %s234
      %s252 = sphi 0, %s252
      %s254 = sphi 0, %s252
      %s255 = sphi 0, %s254
      %s269 = sphi 0, %s255
      %s273 = sphi 0, %s273
      %s275 = sphi 0, %s273
      %s276 = sphi 0, %s275
      %s290 = sphi 0, %s276
      %s294 = sphi 0, %s294
      %s296 = sphi 0, %s294
      %s297 = sphi 0, %s296
      %s311 = sphi 0, %s297
      %s315 = sphi 0, %s315
      %s317 = sphi 0, %s315
      %s318 = sphi 0, %s317
      %s332 = sphi 0, %s318
      %s336 = sphi 0, %s336
      %s338 = sphi 0, %s336
      %s339 = sphi 0, %s338
      %s353 = sphi 0, %s339
      %s357 = sphi 0, %s357
      %s359 = sphi 0, %s357
      %s360 = sphi 0, %s359
      %s374 = sphi 0, %s360
      %s378 = sphi 0, %s378
      %s380 = sphi 0, %s378
      %s381 = sphi 0, %s380
      %s395 = sphi 0, %s381
      %s399 = sphi 0, %s399
      %s401 = sphi 0, %s399
      %s402 = sphi 0, %s401
      %s416 = sphi 0, %s402
      %s420 = sphi 0, %s420
      %s422 = sphi 0, %s420
      %s423 = sphi 0, %s422
      %s437 = sphi 0, %s423
      %s443 = sphi 0, %s445
      %s446 = sphi 0, %s443
      %s447 = sphi 0, %s446
      %s463 = sphi 0, %s447
    $region4: #{tpu_custom_call.1} parent=1 // loop_header_branch
      %32 = sbr.rel (%p30) target = $region8
    $region5: #{tpu_custom_call.1} parent=1 // loop_body
      %s34 = ssub.s32 %s29, 1
      %s35 = ssub.s32 %s29, 2
      %s36 = sadd.s32 %s29, 1
      %s37 = ssub.s32 %s29, %s36
      %p38 = scmp.eq.s32.totalorder %s37, 0
      %s40 = sadd.s32 %s39, 1
      %s41 = scalar_select %p38, %s39, %s40
      %p44 = pneg %p38
      %p45 = scmp.eq.s32.totalorder %s29, 1
      %p46 = por %p44, %p45
      %p47 = scmp.ne.s32.totalorder %s39, %s42
      %p48 = scmp.eq.s32.totalorder %s29, 0
      %p49 = por %p47, %p48
      %p50 = scmp.ne.s32.totalorder %s39, %s42
      %p51 = scmp.eq.s32.totalorder %s34, 1
      %p52 = por %p50, %p51
      %p53 = scmp.ne.s32.totalorder %s42, %s43
      %p54 = scmp.eq.s32.totalorder %s34, 0
      %p55 = por %p53, %p54
      %p56 = scmp.ne.s32.totalorder %s42, %s43
      %p57 = scmp.eq.s32.totalorder %s35, 1
      %p58 = por %p56, %p57
      %p60 = scmp.ne.s32.totalorder %s43, %s59
      %p61 = scmp.eq.s32.totalorder %s35, 0
      %p62 = por %p60, %p61
      %s64 = sadd.s32 %s63, 1
      %p67 = scmp.eq.s32.totalorder %s29, 1
      %p68 = scmp.ne.s32.totalorder %s63, %s65
      %p69 = scmp.eq.s32.totalorder %s29, 0
      %p70 = por %p68, %p69
      %p71 = scmp.ne.s32.totalorder %s63, %s65
      %p72 = scmp.eq.s32.totalorder %s34, 1
      %p73 = por %p71, %p72
      %p74 = scmp.ne.s32.totalorder %s65, %s66
      %p75 = scmp.eq.s32.totalorder %s34, 0
      %p76 = por %p74, %p75
      %p77 = scmp.ne.s32.totalorder %s65, %s66
      %p78 = scmp.eq.s32.totalorder %s35, 1
      %p79 = por %p77, %p78
      %p81 = scmp.ne.s32.totalorder %s66, %s80
      %p82 = scmp.eq.s32.totalorder %s35, 0
      %p83 = por %p81, %p82
      %s85 = sadd.s32 %s84, 1
      %p88 = scmp.eq.s32.totalorder %s29, 1
      %p89 = scmp.ne.s32.totalorder %s84, %s86
      %p90 = scmp.eq.s32.totalorder %s29, 0
      %p91 = por %p89, %p90
      %p92 = scmp.ne.s32.totalorder %s84, %s86
      %p93 = scmp.eq.s32.totalorder %s34, 1
      %p94 = por %p92, %p93
      %p95 = scmp.ne.s32.totalorder %s86, %s87
      %p96 = scmp.eq.s32.totalorder %s34, 0
      %p97 = por %p95, %p96
      %p98 = scmp.ne.s32.totalorder %s86, %s87
      %p99 = scmp.eq.s32.totalorder %s35, 1
      %p100 = por %p98, %p99
      %p102 = scmp.ne.s32.totalorder %s87, %s101
      %p103 = scmp.eq.s32.totalorder %s35, 0
      %p104 = por %p102, %p103
      %s106 = sadd.s32 %s105, 1
      %p109 = scmp.eq.s32.totalorder %s29, 1
      %p110 = scmp.ne.s32.totalorder %s105, %s107
      %p111 = scmp.eq.s32.totalorder %s29, 0
      %p112 = por %p110, %p111
      %p113 = scmp.ne.s32.totalorder %s105, %s107
      %p114 = scmp.eq.s32.totalorder %s34, 1
      %p115 = por %p113, %p114
      %p116 = scmp.ne.s32.totalorder %s107, %s108
      %p117 = scmp.eq.s32.totalorder %s34, 0
      %p118 = por %p116, %p117
      %p119 = scmp.ne.s32.totalorder %s107, %s108
      %p120 = scmp.eq.s32.totalorder %s35, 1
      %p121 = por %p119, %p120
      %p123 = scmp.ne.s32.totalorder %s108, %s122
      %p124 = scmp.eq.s32.totalorder %s35, 0
      %p125 = por %p123, %p124
      %s127 = sadd.s32 %s126, 1
      %p130 = scmp.eq.s32.totalorder %s29, 1
      %p131 = scmp.ne.s32.totalorder %s126, %s128
      %p132 = scmp.eq.s32.totalorder %s29, 0
      %p133 = por %p131, %p132
      %p134 = scmp.ne.s32.totalorder %s126, %s128
      %p135 = scmp.eq.s32.totalorder %s34, 1
      %p136 = por %p134, %p135
      %p137 = scmp.ne.s32.totalorder %s128, %s129
      %p138 = scmp.eq.s32.totalorder %s34, 0
      %p139 = por %p137, %p138
      %p140 = scmp.ne.s32.totalorder %s128, %s129
      %p141 = scmp.eq.s32.totalorder %s35, 1
      %p142 = por %p140, %p141
      %p144 = scmp.ne.s32.totalorder %s129, %s143
      %p145 = scmp.eq.s32.totalorder %s35, 0
      %p146 = por %p144, %p145
      %s148 = sadd.s32 %s147, 1
      %p151 = scmp.eq.s32.totalorder %s29, 1
      %p152 = scmp.ne.s32.totalorder %s147, %s149
      %p153 = scmp.eq.s32.totalorder %s29, 0
      %p154 = por %p152, %p153
      %p155 = scmp.ne.s32.totalorder %s147, %s149
      %p156 = scmp.eq.s32.totalorder %s34, 1
      %p157 = por %p155, %p156
      %p158 = scmp.ne.s32.totalorder %s149, %s150
      %p159 = scmp.eq.s32.totalorder %s34, 0
      %p160 = por %p158, %p159
      %p161 = scmp.ne.s32.totalorder %s149, %s150
      %p162 = scmp.eq.s32.totalorder %s35, 1
      %p163 = por %p161, %p162
      %p165 = scmp.ne.s32.totalorder %s150, %s164
      %p166 = scmp.eq.s32.totalorder %s35, 0
      %p167 = por %p165, %p166
      %s169 = sadd.s32 %s168, 1
      %p172 = scmp.eq.s32.totalorder %s29, 1
      %p173 = scmp.ne.s32.totalorder %s168, %s170
      %p174 = scmp.eq.s32.totalorder %s29, 0
      %p175 = por %p173, %p174
      %p176 = scmp.ne.s32.totalorder %s168, %s170
      %p177 = scmp.eq.s32.totalorder %s34, 1
      %p178 = por %p176, %p177
      %p179 = scmp.ne.s32.totalorder %s170, %s171
      %p180 = scmp.eq.s32.totalorder %s34, 0
      %p181 = por %p179, %p180
      %p182 = scmp.ne.s32.totalorder %s170, %s171
      %p183 = scmp.eq.s32.totalorder %s35, 1
      %p184 = por %p182, %p183
      %p186 = scmp.ne.s32.totalorder %s171, %s185
      %p187 = scmp.eq.s32.totalorder %s35, 0
      %p188 = por %p186, %p187
      %s190 = sadd.s32 %s189, 1
      %p193 = scmp.eq.s32.totalorder %s29, 1
      %p194 = scmp.ne.s32.totalorder %s189, %s191
      %p195 = scmp.eq.s32.totalorder %s29, 0
      %p196 = por %p194, %p195
      %p197 = scmp.ne.s32.totalorder %s189, %s191
      %p198 = scmp.eq.s32.totalorder %s34, 1
      %p199 = por %p197, %p198
      %p200 = scmp.ne.s32.totalorder %s191, %s192
      %p201 = scmp.eq.s32.totalorder %s34, 0
      %p202 = por %p200, %p201
      %p203 = scmp.ne.s32.totalorder %s191, %s192
      %p204 = scmp.eq.s32.totalorder %s35, 1
      %p205 = por %p203, %p204
      %p207 = scmp.ne.s32.totalorder %s192, %s206
      %p208 = scmp.eq.s32.totalorder %s35, 0
      %p209 = por %p207, %p208
      %s211 = sadd.s32 %s210, 1
      %p214 = scmp.eq.s32.totalorder %s29, 1
      %p215 = scmp.ne.s32.totalorder %s210, %s212
      %p216 = scmp.eq.s32.totalorder %s29, 0
      %p217 = por %p215, %p216
      %p218 = scmp.ne.s32.totalorder %s210, %s212
      %p219 = scmp.eq.s32.totalorder %s34, 1
      %p220 = por %p218, %p219
      %p221 = scmp.ne.s32.totalorder %s212, %s213
      %p222 = scmp.eq.s32.totalorder %s34, 0
      %p223 = por %p221, %p222
      %p224 = scmp.ne.s32.totalorder %s212, %s213
      %p225 = scmp.eq.s32.totalorder %s35, 1
      %p226 = por %p224, %p225
      %p228 = scmp.ne.s32.totalorder %s213, %s227
      %p229 = scmp.eq.s32.totalorder %s35, 0
      %p230 = por %p228, %p229
      %s232 = sadd.s32 %s231, 1
      %p235 = scmp.eq.s32.totalorder %s29, 1
      %p236 = scmp.ne.s32.totalorder %s231, %s233
      %p237 = scmp.eq.s32.totalorder %s29, 0
      %p238 = por %p236, %p237
      %p239 = scmp.ne.s32.totalorder %s231, %s233
      %p240 = scmp.eq.s32.totalorder %s34, 1
      %p241 = por %p239, %p240
      %p242 = scmp.ne.s32.totalorder %s233, %s234
      %p243 = scmp.eq.s32.totalorder %s34, 0
      %p244 = por %p242, %p243
      %p245 = scmp.ne.s32.totalorder %s233, %s234
      %p246 = scmp.eq.s32.totalorder %s35, 1
      %p247 = por %p245, %p246
      %p249 = scmp.ne.s32.totalorder %s234, %s248
      %p250 = scmp.eq.s32.totalorder %s35, 0
      %p251 = por %p249, %p250
      %s253 = sadd.s32 %s252, 1
      %p256 = scmp.eq.s32.totalorder %s29, 1
      %p257 = scmp.ne.s32.totalorder %s252, %s254
      %p258 = scmp.eq.s32.totalorder %s29, 0
      %p259 = por %p257, %p258
      %p260 = scmp.ne.s32.totalorder %s252, %s254
      %p261 = scmp.eq.s32.totalorder %s34, 1
      %p262 = por %p260, %p261
      %p263 = scmp.ne.s32.totalorder %s254, %s255
      %p264 = scmp.eq.s32.totalorder %s34, 0
      %p265 = por %p263, %p264
      %p266 = scmp.ne.s32.totalorder %s254, %s255
      %p267 = scmp.eq.s32.totalorder %s35, 1
      %p268 = por %p266, %p267
      %p270 = scmp.ne.s32.totalorder %s255, %s269
      %p271 = scmp.eq.s32.totalorder %s35, 0
      %p272 = por %p270, %p271
      %s274 = sadd.s32 %s273, 1
      %p277 = scmp.eq.s32.totalorder %s29, 1
      %p278 = scmp.ne.s32.totalorder %s273, %s275
      %p279 = scmp.eq.s32.totalorder %s29, 0
      %p280 = por %p278, %p279
      %p281 = scmp.ne.s32.totalorder %s273, %s275
      %p282 = scmp.eq.s32.totalorder %s34, 1
      %p283 = por %p281, %p282
      %p284 = scmp.ne.s32.totalorder %s275, %s276
      %p285 = scmp.eq.s32.totalorder %s34, 0
      %p286 = por %p284, %p285
      %p287 = scmp.ne.s32.totalorder %s275, %s276
      %p288 = scmp.eq.s32.totalorder %s35, 1
      %p289 = por %p287, %p288
      %p291 = scmp.ne.s32.totalorder %s276, %s290
      %p292 = scmp.eq.s32.totalorder %s35, 0
      %p293 = por %p291, %p292
      %s295 = sadd.s32 %s294, 1
      %p298 = scmp.eq.s32.totalorder %s29, 1
      %p299 = scmp.ne.s32.totalorder %s294, %s296
      %p300 = scmp.eq.s32.totalorder %s29, 0
      %p301 = por %p299, %p300
      %p302 = scmp.ne.s32.totalorder %s294, %s296
      %p303 = scmp.eq.s32.totalorder %s34, 1
      %p304 = por %p302, %p303
      %p305 = scmp.ne.s32.totalorder %s296, %s297
      %p306 = scmp.eq.s32.totalorder %s34, 0
      %p307 = por %p305, %p306
      %p308 = scmp.ne.s32.totalorder %s296, %s297
      %p309 = scmp.eq.s32.totalorder %s35, 1
      %p310 = por %p308, %p309
      %p312 = scmp.ne.s32.totalorder %s297, %s311
      %p313 = scmp.eq.s32.totalorder %s35, 0
      %p314 = por %p312, %p313
      %s316 = sadd.s32 %s315, 1
      %p319 = scmp.eq.s32.totalorder %s29, 1
      %p320 = scmp.ne.s32.totalorder %s315, %s317
      %p321 = scmp.eq.s32.totalorder %s29, 0
      %p322 = por %p320, %p321
      %p323 = scmp.ne.s32.totalorder %s315, %s317
      %p324 = scmp.eq.s32.totalorder %s34, 1
      %p325 = por %p323, %p324
      %p326 = scmp.ne.s32.totalorder %s317, %s318
      %p327 = scmp.eq.s32.totalorder %s34, 0
      %p328 = por %p326, %p327
      %p329 = scmp.ne.s32.totalorder %s317, %s318
      %p330 = scmp.eq.s32.totalorder %s35, 1
      %p331 = por %p329, %p330
      %p333 = scmp.ne.s32.totalorder %s318, %s332
      %p334 = scmp.eq.s32.totalorder %s35, 0
      %p335 = por %p333, %p334
      %s337 = sadd.s32 %s336, 1
      %p340 = scmp.eq.s32.totalorder %s29, 1
      %p341 = scmp.ne.s32.totalorder %s336, %s338
      %p342 = scmp.eq.s32.totalorder %s29, 0
      %p343 = por %p341, %p342
      %p344 = scmp.ne.s32.totalorder %s336, %s338
      %p345 = scmp.eq.s32.totalorder %s34, 1
      %p346 = por %p344, %p345
      %p347 = scmp.ne.s32.totalorder %s338, %s339
      %p348 = scmp.eq.s32.totalorder %s34, 0
      %p349 = por %p347, %p348
      %p350 = scmp.ne.s32.totalorder %s338, %s339
      %p351 = scmp.eq.s32.totalorder %s35, 1
      %p352 = por %p350, %p351
      %p354 = scmp.ne.s32.totalorder %s339, %s353
      %p355 = scmp.eq.s32.totalorder %s35, 0
      %p356 = por %p354, %p355
      %s358 = sadd.s32 %s357, 1
      %p361 = scmp.eq.s32.totalorder %s29, 1
      %p362 = scmp.ne.s32.totalorder %s357, %s359
      %p363 = scmp.eq.s32.totalorder %s29, 0
      %p364 = por %p362, %p363
      %p365 = scmp.ne.s32.totalorder %s357, %s359
      %p366 = scmp.eq.s32.totalorder %s34, 1
      %p367 = por %p365, %p366
      %p368 = scmp.ne.s32.totalorder %s359, %s360
      %p369 = scmp.eq.s32.totalorder %s34, 0
      %p370 = por %p368, %p369
      %p371 = scmp.ne.s32.totalorder %s359, %s360
      %p372 = scmp.eq.s32.totalorder %s35, 1
      %p373 = por %p371, %p372
      %p375 = scmp.ne.s32.totalorder %s360, %s374
      %p376 = scmp.eq.s32.totalorder %s35, 0
      %p377 = por %p375, %p376
      %s379 = sadd.s32 %s378, 1
      %p382 = scmp.eq.s32.totalorder %s29, 1
      %p383 = scmp.ne.s32.totalorder %s378, %s380
      %p384 = scmp.eq.s32.totalorder %s29, 0
      %p385 = por %p383, %p384
      %p386 = scmp.ne.s32.totalorder %s378, %s380
      %p387 = scmp.eq.s32.totalorder %s34, 1
      %p388 = por %p386, %p387
      %p389 = scmp.ne.s32.totalorder %s380, %s381
      %p390 = scmp.eq.s32.totalorder %s34, 0
      %p391 = por %p389, %p390
      %p392 = scmp.ne.s32.totalorder %s380, %s381
      %p393 = scmp.eq.s32.totalorder %s35, 1
      %p394 = por %p392, %p393
      %p396 = scmp.ne.s32.totalorder %s381, %s395
      %p397 = scmp.eq.s32.totalorder %s35, 0
      %p398 = por %p396, %p397
      %s400 = sadd.s32 %s399, 1
      %p403 = scmp.eq.s32.totalorder %s29, 1
      %p404 = scmp.ne.s32.totalorder %s399, %s401
      %p405 = scmp.eq.s32.totalorder %s29, 0
      %p406 = por %p404, %p405
      %p407 = scmp.ne.s32.totalorder %s399, %s401
      %p408 = scmp.eq.s32.totalorder %s34, 1
      %p409 = por %p407, %p408
      %p410 = scmp.ne.s32.totalorder %s401, %s402
      %p411 = scmp.eq.s32.totalorder %s34, 0
      %p412 = por %p410, %p411
      %p413 = scmp.ne.s32.totalorder %s401, %s402
      %p414 = scmp.eq.s32.totalorder %s35, 1
      %p415 = por %p413, %p414
      %p417 = scmp.ne.s32.totalorder %s402, %s416
      %p418 = scmp.eq.s32.totalorder %s35, 0
      %p419 = por %p417, %p418
      %s421 = sadd.s32 %s420, 1
      %p424 = scmp.eq.s32.totalorder %s29, 1
      %p425 = scmp.ne.s32.totalorder %s420, %s422
      %p426 = scmp.eq.s32.totalorder %s29, 0
      %p427 = por %p425, %p426
      %p428 = scmp.ne.s32.totalorder %s420, %s422
      %p429 = scmp.eq.s32.totalorder %s34, 1
      %p430 = por %p428, %p429
      %p431 = scmp.ne.s32.totalorder %s422, %s423
      %p432 = scmp.eq.s32.totalorder %s34, 0
      %p433 = por %p431, %p432
      %p434 = scmp.ne.s32.totalorder %s422, %s423
      %p435 = scmp.eq.s32.totalorder %s35, 1
      %p436 = por %p434, %p435
      %p438 = scmp.ne.s32.totalorder %s423, %s437
      %p439 = scmp.eq.s32.totalorder %s35, 0
      %p440 = por %p438, %p439
      %s441 = ssub.s32 %s29, %s36
      %p442 = scmp.eq.s32.totalorder %s441, 0
      %s444 = sadd.s32 %s443, 1
      %s445 = scalar_select %p442, %s443, %s444
      %p448 = pneg %p442
      %p449 = scmp.eq.s32.totalorder %s29, 1
      %p450 = por %p448, %p449
      %p451 = scmp.ne.s32.totalorder %s443, %s446
      %p452 = scmp.eq.s32.totalorder %s29, 0
      %p453 = por %p451, %p452
      %p454 = scmp.ne.s32.totalorder %s443, %s446
      %p455 = scmp.eq.s32.totalorder %s34, 1
      %p456 = por %p454, %p455
      %p457 = scmp.ne.s32.totalorder %s446, %s447
      %p458 = scmp.eq.s32.totalorder %s34, 0
      %p459 = por %p457, %p458
      %p460 = scmp.ne.s32.totalorder %s446, %s447
      %p461 = scmp.eq.s32.totalorder %s35, 1
      %p462 = por %p460, %p461
      %p464 = scmp.ne.s32.totalorder %s447, %s463
      %p465 = scmp.eq.s32.totalorder %s35, 0
      %p466 = por %p464, %p465
      %p467 = scmp.le.s32.totalorder 1, %s29
      %p468 = scmp.lt.s32.totalorder %s29, 3
      %p469 = pnand %p467, %p468
      %p470 = pneg %p469
      // Predicated region
      $region9: #{tpu_custom_call.1} parent=5 // pred_check
        _
      $region10: #{tpu_custom_call.1} parent=5 // pred_check_branch
        %472 = sbr.rel (%p469) target = $region12
      $region11: #{tpu_custom_call.1} parent=5 // pred_region
        %s473 = ssub.s32 %s29, 1
        // Predicated region
        $region13: #{tpu_custom_call.1} parent=11 // pred_check
          %p474 = pneg %p76
        $region14: #{tpu_custom_call.1} parent=11 // pred_check_branch
          %476 = sbr.rel (%p474) target = $region16
        $region15: #{tpu_custom_call.1} parent=11 // pred_region
          _
        $region16: #{tpu_custom_call.1} parent=11 // pred_fallthru
          _
        // Predicated region
        $region17: #{tpu_custom_call.1} parent=11 // pred_check
          %p477 = pneg %p97
        $region18: #{tpu_custom_call.1} parent=11 // pred_check_branch
          %479 = sbr.rel (%p477) target = $region20
        $region19: #{tpu_custom_call.1} parent=11 // pred_region
          _
        $region20: #{tpu_custom_call.1} parent=11 // pred_fallthru
          _
        // Predicated region
        $region21: #{tpu_custom_call.1} parent=11 // pred_check
          %p480 = pneg %p118
        $region22: #{tpu_custom_call.1} parent=11 // pred_check_branch
          %482 = sbr.rel (%p480) target = $region24
        $region23: #{tpu_custom_call.1} parent=11 // pred_region
          _
        $region24: #{tpu_custom_call.1} parent=11 // pred_fallthru
          _
        // Predicated region
        $region25: #{tpu_custom_call.1} parent=11 // pred_check
          %p483 = pneg %p139
        $region26: #{tpu_custom_call.1} parent=11 // pred_check_branch
          %485 = sbr.rel (%p483) target = $region28
        $region27: #{tpu_custom_call.1} parent=11 // pred_region
          _
        $region28: #{tpu_custom_call.1} parent=11 // pred_fallthru
          _
        // Predicated region
        $region29: #{tpu_custom_call.1} parent=11 // pred_check
          %p486 = pneg %p160
        $region30: #{tpu_custom_call.1} parent=11 // pred_check_branch
          %488 = sbr.rel (%p486) target = $region32
        $region31: #{tpu_custom_call.1} parent=11 // pred_region
          _
        $region32: #{tpu_custom_call.1} parent=11 // pred_fallthru
          _
        // Predicated region
        $region33: #{tpu_custom_call.1} parent=11 // pred_check
          %p489 = pneg %p181
        $region34: #{tpu_custom_call.1} parent=11 // pred_check_branch
          %491 = sbr.rel (%p489) target = $region36
        $region35: #{tpu_custom_call.1} parent=11 // pred_region
          _
        $region36: #{tpu_custom_call.1} parent=11 // pred_fallthru
          _
        // Predicated region
        $region37: #{tpu_custom_call.1} parent=11 // pred_check
          %p492 = pneg %p202
        $region38: #{tpu_custom_call.1} parent=11 // pred_check_branch
          %494 = sbr.rel (%p492) target = $region40
        $region39: #{tpu_custom_call.1} parent=11 // pred_region
          _
        $region40: #{tpu_custom_call.1} parent=11 // pred_fallthru
          _
        // Predicated region
        $region41: #{tpu_custom_call.1} parent=11 // pred_check
          %p495 = pneg %p223
        $region42: #{tpu_custom_call.1} parent=11 // pred_check_branch
          %497 = sbr.rel (%p495) target = $region44
        $region43: #{tpu_custom_call.1} parent=11 // pred_region
          _
        $region44: #{tpu_custom_call.1} parent=11 // pred_fallthru
          _
        // Predicated region
        $region45: #{tpu_custom_call.1} parent=11 // pred_check
          %p498 = pneg %p244
        $region46: #{tpu_custom_call.1} parent=11 // pred_check_branch
          %500 = sbr.rel (%p498) target = $region48
        $region47: #{tpu_custom_call.1} parent=11 // pred_region
          _
        $region48: #{tpu_custom_call.1} parent=11 // pred_fallthru
          _
        // Predicated region
        $region49: #{tpu_custom_call.1} parent=11 // pred_check
          %p501 = pneg %p265
        $region50: #{tpu_custom_call.1} parent=11 // pred_check_branch
          %503 = sbr.rel (%p501) target = $region52
        $region51: #{tpu_custom_call.1} parent=11 // pred_region
          _
        $region52: #{tpu_custom_call.1} parent=11 // pred_fallthru
          _
        // Predicated region
        $region53: #{tpu_custom_call.1} parent=11 // pred_check
          %p504 = pneg %p286
        $region54: #{tpu_custom_call.1} parent=11 // pred_check_branch
          %506 = sbr.rel (%p504) target = $region56
        $region55: #{tpu_custom_call.1} parent=11 // pred_region
          _
        $region56: #{tpu_custom_call.1} parent=11 // pred_fallthru
          _
        // Predicated region
        $region57: #{tpu_custom_call.1} parent=11 // pred_check
          %p507 = pneg %p307
        $region58: #{tpu_custom_call.1} parent=11 // pred_check_branch
          %509 = sbr.rel (%p507) target = $region60
        $region59: #{tpu_custom_call.1} parent=11 // pred_region
          _
        $region60: #{tpu_custom_call.1} parent=11 // pred_fallthru
          _
        // Predicated region
        $region61: #{tpu_custom_call.1} parent=11 // pred_check
          %p510 = pneg %p328
        $region62: #{tpu_custom_call.1} parent=11 // pred_check_branch
          %512 = sbr.rel (%p510) target = $region64
        $region63: #{tpu_custom_call.1} parent=11 // pred_region
          _
        $region64: #{tpu_custom_call.1} parent=11 // pred_fallthru
          _
        // Predicated region
        $region65: #{tpu_custom_call.1} parent=11 // pred_check
          %p513 = pneg %p349
        $region66: #{tpu_custom_call.1} parent=11 // pred_check_branch
          %515 = sbr.rel (%p513) target = $region68
        $region67: #{tpu_custom_call.1} parent=11 // pred_region
          _
        $region68: #{tpu_custom_call.1} parent=11 // pred_fallthru
          _
        // Predicated region
        $region69: #{tpu_custom_call.1} parent=11 // pred_check
          %p516 = pneg %p370
        $region70: #{tpu_custom_call.1} parent=11 // pred_check_branch
          %518 = sbr.rel (%p516) target = $region72
        $region71: #{tpu_custom_call.1} parent=11 // pred_region
          _
        $region72: #{tpu_custom_call.1} parent=11 // pred_fallthru
          _
        // Predicated region
        $region73: #{tpu_custom_call.1} parent=11 // pred_check
          %p519 = pneg %p391
        $region74: #{tpu_custom_call.1} parent=11 // pred_check_branch
          %521 = sbr.rel (%p519) target = $region76
        $region75: #{tpu_custom_call.1} parent=11 // pred_region
          _
        $region76: #{tpu_custom_call.1} parent=11 // pred_fallthru
          _
        // Predicated region
        $region77: #{tpu_custom_call.1} parent=11 // pred_check
          %p522 = pneg %p412
        $region78: #{tpu_custom_call.1} parent=11 // pred_check_branch
          %524 = sbr.rel (%p522) target = $region80
        $region79: #{tpu_custom_call.1} parent=11 // pred_region
          _
        $region80: #{tpu_custom_call.1} parent=11 // pred_fallthru
          _
        // Predicated region
        $region81: #{tpu_custom_call.1} parent=11 // pred_check
          %p525 = pneg %p433
        $region82: #{tpu_custom_call.1} parent=11 // pred_check_branch
          %527 = sbr.rel (%p525) target = $region84
        $region83: #{tpu_custom_call.1} parent=11 // pred_region
          _
        $region84: #{tpu_custom_call.1} parent=11 // pred_fallthru
          _
      $region12: #{tpu_custom_call.1} parent=5 // pred_fallthru
        _
      %p528 = scmp.lt.s32.totalorder %s29, 2
      // Predicated region
      $region85: #{tpu_custom_call.1} parent=5 // pred_check
        %p529 = pneg %p528
      $region86: #{tpu_custom_call.1} parent=5 // pred_check_branch
        %531 = sbr.rel (%p529) target = $region88
      $region87: #{tpu_custom_call.1} parent=5 // pred_region
        // Predicated region
        $region89: #{tpu_custom_call.1} parent=87 // pred_check
          %p532 = pneg %p49
        $region90: #{tpu_custom_call.1} parent=87 // pred_check_branch
          %534 = sbr.rel (%p532) target = $region92
        $region91: #{tpu_custom_call.1} parent=87 // pred_region
          %p535 = scmp.lt.s32.totalorder %s29, 1
          %s536 = scalar_select %p535, %s29, 1
          %s537 = scalar_lea.vmem %s0, %s536
        $region92: #{tpu_custom_call.1} parent=87 // pred_fallthru
          _
      $region88: #{tpu_custom_call.1} parent=5 // pred_fallthru
        _
      %p538 = scmp.le.s32.totalorder 1, %s29
      %p539 = scmp.lt.s32.totalorder %s29, 3
      %p540 = pnand %p538, %p539
      %p541 = pneg %p540
      // Predicated region
      $region93: #{tpu_custom_call.1} parent=5 // pred_check
        _
      $region94: #{tpu_custom_call.1} parent=5 // pred_check_branch
        %543 = sbr.rel (%p540) target = $region96
      $region95: #{tpu_custom_call.1} parent=5 // pred_region
        %s544 = ssub.s32 %s29, 1
        %p545 = scmp.lt.s32.totalorder %s34, 1
        %s546 = scalar_select %p545, %s34, 1
        %s547 = scalar_lea.vmem %s0, %s546
        %p548 = pneg %p55
        %p549 = pneg %p52
        %p550 = pneg %p76
        %p551 = pneg %p73
        %p552 = pneg %p97
        %p553 = pneg %p94
        %p554 = pneg %p118
        %p555 = pneg %p115
        %p556 = pneg %p139
        %p557 = pneg %p136
        %p558 = pneg %p160
        %p559 = pneg %p157
        %p560 = pneg %p181
        %p561 = pneg %p178
        %p562 = pneg %p202
        %p563 = pneg %p199
        %p564 = pneg %p223
        %p565 = pneg %p220
        %p566 = pneg %p244
        %p567 = pneg %p241
        %p568 = pneg %p265
        %p569 = pneg %p262
        %p570 = pneg %p286
        %p571 = pneg %p283
        %p572 = pneg %p307
        %p573 = pneg %p304
        %p574 = pneg %p328
        %p575 = pneg %p325
        %p576 = pneg %p349
        %p577 = pneg %p346
        %p578 = pneg %p370
        %p579 = pneg %p367
        %p580 = pneg %p391
        %p581 = pneg %p388
        %p582 = pneg %p412
        %p583 = pneg %p409
        %p584 = pneg %p433
        %p585 = pneg %p430
        %p586 = pneg %p459
        %p587 = pneg %p456
        %s588 = sand.u32 %s446, 1
        %s589 = scalar_lea.sflag [#allocation5], %s588
        %s590 = sand.u32 %s446, 1
        %s591 = smul.addr %s590, 8
        %s592 = scalar_lea.vmem [#allocation4], %s591
        %p593 = scmp.lt.s32.totalorder %s34, 1
        %s594 = scalar_select %p593, %s34, 1
        %s595 = scalar_lea.vmem %s0, %s594
        %v597 = vld [vmem:[%s595] sm:$0x1]
        %v599 = vlaneseq
        %v600 = vshrl.u32 %v599, 7
        %v601 = vsub.s32 0, %v600
        %v602 = vrot.slane %v597, %v601
        %603 = vrot.lane.b32.xlu0 %v602, 1
        %v604 = vpop.permute.xlu0 %603
        %vm606 = vcmask 7168
        %v607 = vsel %vm606, 0.0, %v604
        %vm608 = vcmask 138240
        %v609 = vsel %vm608, %v607, 0.0
        %v610 = vld [vmem:[%s1] sm:$0xff]
        %612 = vset.pattern.permute.xlu0 0
        %613 = vperm.xlu0 %612, %v610
        %v614 = vpop.permute.xlu0 %613
        %v616 = vlaneseq
        %v617 = vshrl.u32 %v616, 7
        %v618 = vsub.s32 0, %v617
        %v619 = vrot.slane %v609, %v618
        %v620 = vmul.f32 %v614, %v619
        %621 = vset.pattern.permute.xlu0 1
        %622 = vperm.xlu0 %621, %v610
        %v623 = vpop.permute.xlu0 %622
        %v625 = vmul.f32 %v623, %v619
        %626 = vset.pattern.permute.xlu0 2
        %627 = vperm.xlu0 %626, %v610
        %v628 = vpop.permute.xlu0 %627
        %v630 = vmul.f32 %v628, %v619
        %632 = vrot.lane.b32.xlu0 %v630, 126
        %v633 = vpop.permute.xlu0 %632
        %v635 = vadd.f32 %v620, %v633
        %637 = vrot.lane.b32.xlu0 %v625, 127
        %v638 = vpop.permute.xlu0 %637
        %v640 = vadd.f32 %v635, %v638
        %v641 = vld [vmem:[%s2] sm:$0xff]
        %643 = vset.pattern.permute.xlu0 0
        %644 = vperm.xlu0 %643, %v641
        %v645 = vpop.permute.xlu0 %644
        %v647 = vadd.f32 %v640, %v645
        %v648 = vmin.f32 %v647, 20.0
        %v649 = vmul.f32 %v648, 1.442695
        %v650 = vpow.pop %v649
        %v651 = vadd.f32 %v650, 2.0
        %v652 = vmul.f32 %v650, %v651
        %v653 = vmul.f32 %v647, %v652
        %v654 = vadd.f32 %v652, 2.0
        %v655 = vrcp.pop %v654
        %v656 = vmul.f32 %v653, %v655
        %vm657 = vcmp.gt.f32.partialorder %v647, 20.0
        %v658 = vsel %vm657, %v647, %v656
        %v659 = vld [vmem:[%s9] sm:$0xff]
        %v660 = vld [vmem:[%s9 + $0x8] sm:$0xff]
        %v661 = vld [vmem:[%s3] sm:$0xf]
        %v662 = vld [vmem:[%s3 + $0x4] sm:$0xf]
        %v663 = vpack.c.bf16 %v658, %v658
        %665 = vset.pattern.permute.xlu0 0
        %666 = vperm.xlu0 %665, %v659
        %v667 = vpop.permute.xlu0 %666
        %670 = vset.pattern.permute.xlu0 0
        %671 = vperm.xlu0 %670, %v660
        %v672 = vpop.permute.xlu0 %671
        %v676 = vunpack.c.l.b16 %v661
        %v677 = vunpack.c.l.b16 %v662
        %v678 = vpack.c.b16 %v677, %v676
        %vm679 = vcmask 64512
        %v681 = vsel %vm679, %v678, 0
        %vm683 = vcmask 1043456
        %v685 = vsel %vm683, %v663, 0
        %687 = vmatprep.subr.bf16.mxu0 0
        %688 = vmatpush1.bf16.msra.mxu0 %v685
        %689 = vmatprep.subr.bf16.mxu0 0
        %690 = vmatpush1.bf16.msra.mxu0 0
        %691 = vmatprep.subr.bf16.mxu0 0
        %692 = vmatpush1.bf16.msra.mxu0 0
        %693 = vmatprep.subr.bf16.mxu0 0
        %694 = vmatpush1.bf16.msra.mxu0 0
        %695 = vmatprep.subr.bf16.mxu0 0
        %696 = vmatpush1.bf16.msra.mxu0 0
        %697 = vmatprep.subr.bf16.mxu0 0
        %698 = vmatpush1.bf16.msra.mxu0 0
        %699 = vmatprep.subr.bf16.mxu0 0
        %700 = vmatpush1.bf16.msra.mxu0 0
        %701 = vmatprep.subr.bf16.mxu0 0
        %702 = vmatpush1.bf16.msra.mxu0 0
        %703 = vmatprep.subr.bf16.mxu0 0
        %704 = vmatpush1.bf16.msra.mxu0 0
        %705 = vmatprep.subr.bf16.mxu0 0
        %706 = vmatpush1.bf16.msra.mxu0 0
        %707 = vmatprep.subr.bf16.mxu0 0
        %708 = vmatpush1.bf16.msra.mxu0 0
        %709 = vmatprep.subr.bf16.mxu0 0
        %710 = vmatpush1.bf16.msra.mxu0 0
        %711 = vmatprep.subr.bf16.mxu0 0
        %712 = vmatpush1.bf16.msra.mxu0 0
        %713 = vmatprep.subr.bf16.mxu0 0
        %714 = vmatpush1.bf16.msra.mxu0 0
        %715 = vmatprep.subr.bf16.mxu0 0
        %716 = vmatpush1.bf16.msra.mxu0 0
        %717 = vmatprep.subr.bf16.mxu0 0
        %718 = vmatpush1.bf16.msra.mxu0 0
        %719 = vmatprep.mubr.bf16.mxu0 0
        %720 = vmatmul.mubr.bf16.gmra.mrb[0].mxu0 %v681
        %v721 = vpop.f32.mrb[0].mxu0
        %v722 = vadd.f32 %v667, %v721
        %v723 = vpop.f32.mrb[0].mxu0
        %v724 = vpop.f32.mrb[0].mxu0
        %v725 = vadd.f32 %v672, %v724
        %v726 = vpop.f32.mrb[0].mxu0
        %727 = vdwg.mxu0
        %v728 = vmin.f32 %v722, 20.0
        %v729 = vmin.f32 %v725, 20.0
        %v730 = vmul.f32 %v728, 1.442695
        %v731 = vpow.pop %v730
        %v732 = vmul.f32 %v729, 1.442695
        %v733 = vpow.pop %v732
        %v734 = vadd.f32 %v731, 2.0
        %v735 = vadd.f32 %v733, 2.0
        %v736 = vmul.f32 %v731, %v734
        %v737 = vmul.f32 %v733, %v735
        %v738 = vmul.f32 %v722, %v736
        %v739 = vmul.f32 %v725, %v737
        %v740 = vadd.f32 %v736, 2.0
        %v741 = vadd.f32 %v737, 2.0
        %v742 = vrcp.pop %v740
        %v743 = vrcp.pop %v741
        %v744 = vmul.f32 %v738, %v742
        %v745 = vmul.f32 %v739, %v743
        %vm746 = vcmp.gt.f32.partialorder %v722, 20.0
        %vm747 = vcmp.gt.f32.partialorder %v725, 20.0
        %v748 = vsel %vm746, %v722, %v744
        %v749 = vsel %vm747, %v725, %v745
        %v750 = vld [vmem:[%s4] sm:$0xff]
        %v751 = vld [vmem:[%s4 + $0x8] sm:$0xff]
        %vm752 = vcmask 15360
        %753 = vst.msk [vmem:[#allocation2] sm:$0xff] %vm752, 0.0
        %754 = vst.msk [vmem:[#allocation2 + $0x8] sm:$0xff] %vm752, 0.0
        %757 = vrot.lane.b32.xlu0 %v748, 2
        %v758 = vpop.permute.xlu0 %757
        %759 = vrot.lane.b32.xlu0 %v749, 2
        %v760 = vpop.permute.xlu0 %759
        %vm763 = vcmask 146448
        %764 = vst.msk [vmem:[#allocation2] sm:$0xff] %vm763, %v758
        %765 = vst.msk [vmem:[#allocation2 + $0x8] sm:$0xff] %vm763, %v760
        %vm766 = vcmask 1047696
        %767 = vst.msk [vmem:[#allocation2] sm:$0xff] %vm766, 0.0
        %768 = vst.msk [vmem:[#allocation2 + $0x8] sm:$0xff] %vm766, 0.0
        %v769 = vld [vmem:[#allocation2] sm:$0xff]
        %v770 = vld [vmem:[#allocation2 + $0x8] sm:$0xff]
        %772 = vset.pattern.permute.xlu0 0
        %773 = vperm.xlu0 %772, %v750
        %v774 = vpop.permute.xlu0 %773
        %777 = vset.pattern.permute.xlu0 0
        %778 = vperm.xlu0 %777, %v751
        %v779 = vpop.permute.xlu0 %778
        %v781 = vmul.f32 %v774, %v769
        %v782 = vmul.f32 %v779, %v770
        %783 = vset.pattern.permute.xlu0 1
        %784 = vperm.xlu0 %783, %v750
        %v785 = vpop.permute.xlu0 %784
        %787 = vset.pattern.permute.xlu0 1
        %788 = vperm.xlu0 %787, %v751
        %v789 = vpop.permute.xlu0 %788
        %v791 = vmul.f32 %v785, %v769
        %v792 = vmul.f32 %v789, %v770
        %793 = vset.pattern.permute.xlu0 2
        %794 = vperm.xlu0 %793, %v750
        %v795 = vpop.permute.xlu0 %794
        %797 = vset.pattern.permute.xlu0 2
        %798 = vperm.xlu0 %797, %v751
        %v799 = vpop.permute.xlu0 %798
        %v801 = vmul.f32 %v795, %v769
        %v802 = vmul.f32 %v799, %v770
        %803 = vset.pattern.permute.xlu0 3
        %804 = vperm.xlu0 %803, %v750
        %v805 = vpop.permute.xlu0 %804
        %807 = vset.pattern.permute.xlu0 3
        %808 = vperm.xlu0 %807, %v751
        %v809 = vpop.permute.xlu0 %808
        %v811 = vmul.f32 %v805, %v769
        %v812 = vmul.f32 %v809, %v770
        %813 = vset.pattern.permute.xlu0 4
        %814 = vperm.xlu0 %813, %v750
        %v815 = vpop.permute.xlu0 %814
        %817 = vset.pattern.permute.xlu0 4
        %818 = vperm.xlu0 %817, %v751
        %v819 = vpop.permute.xlu0 %818
        %v821 = vmul.f32 %v815, %v769
        %v822 = vmul.f32 %v819, %v770
        %825 = vrot.lane.b32.xlu0 %v801, 126
        %v826 = vpop.permute.xlu0 %825
        %827 = vrot.lane.b32.xlu0 %v802, 126
        %v828 = vpop.permute.xlu0 %827
        %v831 = vadd.f32 %v781, %v826
        %v832 = vadd.f32 %v782, %v828
        %835 = vrot.lane.b32.xlu0 %v811, 126
        %v836 = vpop.permute.xlu0 %835
        %837 = vrot.lane.b32.xlu0 %v812, 126
        %v838 = vpop.permute.xlu0 %837
        %v841 = vadd.f32 %v791, %v836
        %v842 = vadd.f32 %v792, %v838
        %845 = vrot.lane.b32.xlu0 %v821, 124
        %v846 = vpop.permute.xlu0 %845
        %847 = vrot.lane.b32.xlu0 %v822, 124
        %v848 = vpop.permute.xlu0 %847
        %v851 = vadd.f32 %v831, %v846
        %v852 = vadd.f32 %v832, %v848
        %855 = vrot.lane.b32.xlu0 %v841, 127
        %v856 = vpop.permute.xlu0 %855
        %857 = vrot.lane.b32.xlu0 %v842, 127
        %v858 = vpop.permute.xlu0 %857
        %v861 = vadd.f32 %v851, %v856
        %v862 = vadd.f32 %v852, %v858
        %863 = vset.pattern.permute.xlu0 1
        %864 = vperm.xlu0 %863, %v659
        %v865 = vpop.permute.xlu0 %864
        %867 = vset.pattern.permute.xlu0 1
        %868 = vperm.xlu0 %867, %v660
        %v869 = vpop.permute.xlu0 %868
        %v871 = vadd.f32 %v861, %v865
        %v872 = vadd.f32 %v862, %v869
        %v873 = vmin.f32 %v871, 20.0
        %v874 = vmin.f32 %v872, 20.0
        %v875 = vmul.f32 %v873, 1.442695
        %v876 = vpow.pop %v875
        %v877 = vmul.f32 %v874, 1.442695
        %v878 = vpow.pop %v877
        %v879 = vadd.f32 %v876, 2.0
        %v880 = vadd.f32 %v878, 2.0
        %v881 = vmul.f32 %v876, %v879
        %v882 = vmul.f32 %v878, %v880
        %v883 = vmul.f32 %v871, %v881
        %v884 = vmul.f32 %v872, %v882
        %v885 = vadd.f32 %v881, 2.0
        %v886 = vadd.f32 %v882, 2.0
        %v887 = vrcp.pop %v885
        %v888 = vrcp.pop %v886
        %v889 = vmul.f32 %v883, %v887
        %v890 = vmul.f32 %v884, %v888
        %vm891 = vcmp.gt.f32.partialorder %v871, 20.0
        %vm892 = vcmp.gt.f32.partialorder %v872, 20.0
        %v893 = vsel %vm891, %v871, %v889
        %v894 = vsel %vm892, %v872, %v890
        %vm895 = vcmask 130048
        %v896 = vsel %vm895, %v893, 0.0
        %897 = vadd.xlane.f32.xlu0 %v896
        %v898 = vpop.xlane.xlu0 %897
        %v899 = vsel %vm895, %v894, 0.0
        %900 = vadd.xlane.f32.xlu0 %v899
        %v901 = vpop.xlane.xlu0 %900
        %v902 = vrcp.pop 16.0
        %v903 = vmul.f32 %v898, %v902
        %v904 = vmul.f32 %v901, %v902
        %v905 = vld [vmem:[%s5] sm:$0xff]
        %v906 = vld [vmem:[%s5 + $0x8] sm:$0xff]
        %v907 = vmul.f32 %v905, %v903
        %v908 = vmul.f32 %v906, %v904
        %vm909 = vcmask 31744
        %v910 = vsel %vm909, %v907, 0.0
        %v911 = vsel %vm909, %v908, 0.0
        %v912 = vadd.f32 %v910, %v911
        %v913 = vrot.slane %v912, 4
        %v914 = vadd.f32 %v912, %v913
        %v915 = vrot.slane %v914, 2
        %v916 = vadd.f32 %v914, %v915
        %v917 = vrot.slane %v916, 1
        %v918 = vadd.f32 %v916, %v917
        %v919 = vld [vmem:[%s6] sm:$0x1]
        %v920 = vadd.f32 %v918, %v919
        %v921 = vmin.f32 %v920, 20.0
        %v922 = vmul.f32 %v921, 1.442695
        %v923 = vpow.pop %v922
        %v924 = vadd.f32 %v923, 2.0
        %v925 = vmul.f32 %v923, %v924
        %v926 = vmul.f32 %v920, %v925
        %v927 = vadd.f32 %v925, 2.0
        %v928 = vrcp.pop %v927
        %v929 = vmul.f32 %v926, %v928
        %vm930 = vcmp.gt.f32.partialorder %v920, 20.0
        %v931 = vsel %vm930, %v920, %v929
        %v932 = vld [vmem:[%s7] sm:$0xff]
        %v933 = vld [vmem:[%s7 + $0x8] sm:$0xff]
        %v934 = vlaneseq
        %v935 = vshrl.u32 %v934, 7
        %v936 = vsub.s32 0, %v935
        %v937 = vrot.slane %v931, %v936
        %v938 = vmul.f32 %v932, %v937
        %v939 = vmul.f32 %v933, %v937
        %v940 = vsel %vm909, %v938, 0.0
        %941 = vadd.xlane.f32.xlu0 %v940
        %v942 = vpop.xlane.xlu0 %941
        %v943 = vsel %vm909, %v939, 0.0
        %944 = vadd.xlane.f32.xlu0 %v943
        %v945 = vpop.xlane.xlu0 %944
        %v946 = vadd.f32 %v942, %v659
        %v947 = vadd.f32 %v945, %v660
        %v948 = vand.u32 2147483647, %v946
        %v949 = vand.u32 2147483647, %v947
        %v950 = vsub.f32 0.0, %v948
        %v951 = vsub.f32 0.0, %v949
        %v952 = vmul.f32 %v950, 1.442695
        %v953 = vpow.pop %v952
        %v954 = vmul.f32 %v951, 1.442695
        %v955 = vpow.pop %v954
        %v956 = vadd.f32 %v953, 1.0
        %v957 = vadd.f32 %v955, 1.0
        %v958 = vrcp.pop %v956
        %v959 = vrcp.pop %v957
        %vm960 = vcmp.ge.f32.partialorder %v946, 0.0
        %vm961 = vcmp.ge.f32.partialorder %v947, 0.0
        %v962 = vmul.f32 %v953, %v958
        %v963 = vmul.f32 %v955, %v959
        %v964 = vsel %vm960, %v958, %v962
        %v965 = vsel %vm961, %v959, %v963
        %967 = vset.pattern.permute.xlu0 2
        %968 = vperm.xlu0 %967, %v964
        %v969 = vpop.permute.xlu0 %968
        %972 = vset.pattern.permute.xlu0 2
        %973 = vperm.xlu0 %972, %v965
        %v974 = vpop.permute.xlu0 %973
        %v976 = vmul.f32 %v893, %v969
        %v977 = vmul.f32 %v894, %v974
        %v978 = vld [vmem:[%s8] sm:$0xf]
        %v979 = vld [vmem:[%s8 + $0x4] sm:$0xf]
        %v980 = vpack.c.bf16 %v977, %v976
        %981 = vset.pattern.permute.xlu0 3
        %982 = vperm.xlu0 %981, %v659
        %v983 = vpop.permute.xlu0 %982
        %985 = vset.pattern.permute.xlu0 3
        %986 = vperm.xlu0 %985, %v660
        %v987 = vpop.permute.xlu0 %986
        %v991 = vunpack.c.l.b16 %v978
        %v992 = vunpack.c.l.b16 %v979
        %v993 = vpack.c.b16 %v992, %v991
        %v995 = vsel %vm895, %v993, 0
        %997 = vmatprep.subr.bf16.mxu0 0
        %998 = vmatpush1.bf16.msra.mxu0 %v980
        %999 = vmatprep.subr.bf16.mxu0 0
        %1000 = vmatpush1.bf16.msra.mxu0 0
        %1001 = vmatprep.subr.bf16.mxu0 0
        %1002 = vmatpush1.bf16.msra.mxu0 0
        %1003 = vmatprep.subr.bf16.mxu0 0
        %1004 = vmatpush1.bf16.msra.mxu0 0
        %1005 = vmatprep.subr.bf16.mxu0 0
        %1006 = vmatpush1.bf16.msra.mxu0 0
        %1007 = vmatprep.subr.bf16.mxu0 0
        %1008 = vmatpush1.bf16.msra.mxu0 0
        %1009 = vmatprep.subr.bf16.mxu0 0
        %1010 = vmatpush1.bf16.msra.mxu0 0
        %1011 = vmatprep.subr.bf16.mxu0 0
        %1012 = vmatpush1.bf16.msra.mxu0 0
        %1013 = vmatprep.subr.bf16.mxu0 0
        %1014 = vmatpush1.bf16.msra.mxu0 0
        %1015 = vmatprep.subr.bf16.mxu0 0
        %1016 = vmatpush1.bf16.msra.mxu0 0
        %1017 = vmatprep.subr.bf16.mxu0 0
        %1018 = vmatpush1.bf16.msra.mxu0 0
        %1019 = vmatprep.subr.bf16.mxu0 0
        %1020 = vmatpush1.bf16.msra.mxu0 0
        %1021 = vmatprep.subr.bf16.mxu0 0
        %1022 = vmatpush1.bf16.msra.mxu0 0
        %1023 = vmatprep.subr.bf16.mxu0 0
        %1024 = vmatpush1.bf16.msra.mxu0 0
        %1025 = vmatprep.subr.bf16.mxu0 0
        %1026 = vmatpush1.bf16.msra.mxu0 0
        %1027 = vmatprep.subr.bf16.mxu0 0
        %1028 = vmatpush1.bf16.msra.mxu0 0
        %1029 = vmatprep.mubr.bf16.mxu0 0
        %1030 = vmatmul.mubr.bf16.gmra.mrb[0].mxu0 %v995
        %v1031 = vpop.f32.mrb[0].mxu0
        %v1032 = vadd.f32 %v983, %v1031
        %v1033 = vpop.f32.mrb[0].mxu0
        %v1034 = vpop.f32.mrb[0].mxu0
        %v1035 = vadd.f32 %v987, %v1034
        %v1036 = vpop.f32.mrb[0].mxu0
        %1037 = vdwg.mxu0
        %v1038 = vmin.f32 %v1032, 20.0
        %v1039 = vmin.f32 %v1035, 20.0
        %v1040 = vmul.f32 %v1038, 1.442695
        %v1041 = vpow.pop %v1040
        %v1042 = vmul.f32 %v1039, 1.442695
        %v1043 = vpow.pop %v1042
        %v1044 = vadd.f32 %v1041, 2.0
        %v1045 = vadd.f32 %v1043, 2.0
        %v1046 = vmul.f32 %v1041, %v1044
        %v1047 = vmul.f32 %v1043, %v1045
        %v1048 = vmul.f32 %v1032, %v1046
        %v1049 = vmul.f32 %v1035, %v1047
        %v1050 = vadd.f32 %v1046, 2.0
        %v1051 = vadd.f32 %v1047, 2.0
        %v1052 = vrcp.pop %v1050
        %v1053 = vrcp.pop %v1051
        %v1054 = vmul.f32 %v1048, %v1052
        %v1055 = vmul.f32 %v1049, %v1053
        %vm1056 = vcmp.gt.f32.partialorder %v1032, 20.0
        %vm1057 = vcmp.gt.f32.partialorder %v1035, 20.0
        %v1058 = vsel %vm1056, %v1032, %v1054
        %v1059 = vsel %vm1057, %v1035, %v1055
        %v1060 = vld [vmem:[%s15] sm:$0xff]
        %v1061 = vld [vmem:[%s15 + $0x8] sm:$0xff]
        %v1062 = vld [vmem:[%s10] sm:$0xff]
        %v1063 = vld [vmem:[%s10 + $0x8] sm:$0xff]
        %1064 = vst.msk [vmem:[#allocation2] sm:$0xff] %vm752, 0.0
        %1065 = vst.msk [vmem:[#allocation2 + $0x8] sm:$0xff] %vm752, 0.0
        %1068 = vrot.lane.b32.xlu0 %v1058, 2
        %v1069 = vpop.permute.xlu0 %1068
        %1070 = vrot.lane.b32.xlu0 %v1059, 2
        %v1071 = vpop.permute.xlu0 %1070
        %1074 = vst.msk [vmem:[#allocation2] sm:$0xff] %vm763, %v1069
        %1075 = vst.msk [vmem:[#allocation2 + $0x8] sm:$0xff] %vm763, %v1071
        %1076 = vst.msk [vmem:[#allocation2] sm:$0xff] %vm766, 0.0
        %1077 = vst.msk [vmem:[#allocation2 + $0x8] sm:$0xff] %vm766, 0.0
        %v1078 = vld [vmem:[#allocation2] sm:$0xff]
        %v1079 = vld [vmem:[#allocation2 + $0x8] sm:$0xff]
        %1081 = vset.pattern.permute.xlu0 0
        %1082 = vperm.xlu0 %1081, %v1062
        %v1083 = vpop.permute.xlu0 %1082
        %1086 = vset.pattern.permute.xlu0 0
        %1087 = vperm.xlu0 %1086, %v1063
        %v1088 = vpop.permute.xlu0 %1087
        %v1090 = vmul.f32 %v1083, %v1078
        %v1091 = vmul.f32 %v1088, %v1079
        %1092 = vset.pattern.permute.xlu0 1
        %1093 = vperm.xlu0 %1092, %v1062
        %v1094 = vpop.permute.xlu0 %1093
        %1096 = vset.pattern.permute.xlu0 1
        %1097 = vperm.xlu0 %1096, %v1063
        %v1098 = vpop.permute.xlu0 %1097
        %v1100 = vmul.f32 %v1094, %v1078
        %v1101 = vmul.f32 %v1098, %v1079
        %1102 = vset.pattern.permute.xlu0 2
        %1103 = vperm.xlu0 %1102, %v1062
        %v1104 = vpop.permute.xlu0 %1103
        %1106 = vset.pattern.permute.xlu0 2
        %1107 = vperm.xlu0 %1106, %v1063
        %v1108 = vpop.permute.xlu0 %1107
        %v1110 = vmul.f32 %v1104, %v1078
        %v1111 = vmul.f32 %v1108, %v1079
        %1112 = vset.pattern.permute.xlu0 3
        %1113 = vperm.xlu0 %1112, %v1062
        %v1114 = vpop.permute.xlu0 %1113
        %1116 = vset.pattern.permute.xlu0 3
        %1117 = vperm.xlu0 %1116, %v1063
        %v1118 = vpop.permute.xlu0 %1117
        %v1120 = vmul.f32 %v1114, %v1078
        %v1121 = vmul.f32 %v1118, %v1079
        %1122 = vset.pattern.permute.xlu0 4
        %1123 = vperm.xlu0 %1122, %v1062
        %v1124 = vpop.permute.xlu0 %1123
        %1126 = vset.pattern.permute.xlu0 4
        %1127 = vperm.xlu0 %1126, %v1063
        %v1128 = vpop.permute.xlu0 %1127
        %v1130 = vmul.f32 %v1124, %v1078
        %v1131 = vmul.f32 %v1128, %v1079
        %1134 = vrot.lane.b32.xlu0 %v1110, 126
        %v1135 = vpop.permute.xlu0 %1134
        %1136 = vrot.lane.b32.xlu0 %v1111, 126
        %v1137 = vpop.permute.xlu0 %1136
        %v1140 = vadd.f32 %v1090, %v1135
        %v1141 = vadd.f32 %v1091, %v1137
        %1144 = vrot.lane.b32.xlu0 %v1120, 126
        %v1145 = vpop.permute.xlu0 %1144
        %1146 = vrot.lane.b32.xlu0 %v1121, 126
        %v1147 = vpop.permute.xlu0 %1146
        %v1150 = vadd.f32 %v1100, %v1145
        %v1151 = vadd.f32 %v1101, %v1147
        %1154 = vrot.lane.b32.xlu0 %v1130, 124
        %v1155 = vpop.permute.xlu0 %1154
        %1156 = vrot.lane.b32.xlu0 %v1131, 124
        %v1157 = vpop.permute.xlu0 %1156
        %v1160 = vadd.f32 %v1140, %v1155
        %v1161 = vadd.f32 %v1141, %v1157
        %1164 = vrot.lane.b32.xlu0 %v1150, 127
        %v1165 = vpop.permute.xlu0 %1164
        %1166 = vrot.lane.b32.xlu0 %v1151, 127
        %v1167 = vpop.permute.xlu0 %1166
        %v1170 = vadd.f32 %v1160, %v1165
        %v1171 = vadd.f32 %v1161, %v1167
        %1173 = vset.pattern.permute.xlu0 0
        %1174 = vperm.xlu0 %1173, %v1060
        %v1175 = vpop.permute.xlu0 %1174
        %1178 = vset.pattern.permute.xlu0 0
        %1179 = vperm.xlu0 %1178, %v1061
        %v1180 = vpop.permute.xlu0 %1179
        %v1182 = vadd.f32 %v1170, %v1175
        %v1183 = vadd.f32 %v1171, %v1180
        %v1184 = vmin.f32 %v1182, 20.0
        %v1185 = vmin.f32 %v1183, 20.0
        %v1186 = vmul.f32 %v1184, 1.442695
        %v1187 = vpow.pop %v1186
        %v1188 = vmul.f32 %v1185, 1.442695
        %v1189 = vpow.pop %v1188
        %v1190 = vadd.f32 %v1187, 2.0
        %v1191 = vadd.f32 %v1189, 2.0
        %v1192 = vmul.f32 %v1187, %v1190
        %v1193 = vmul.f32 %v1189, %v1191
        %v1194 = vmul.f32 %v1182, %v1192
        %v1195 = vmul.f32 %v1183, %v1193
        %v1196 = vadd.f32 %v1192, 2.0
        %v1197 = vadd.f32 %v1193, 2.0
        %v1198 = vrcp.pop %v1196
        %v1199 = vrcp.pop %v1197
        %v1200 = vmul.f32 %v1194, %v1198
        %v1201 = vmul.f32 %v1195, %v1199
        %vm1202 = vcmp.gt.f32.partialorder %v1182, 20.0
        %vm1203 = vcmp.gt.f32.partialorder %v1183, 20.0
        %v1204 = vsel %vm1202, %v1182, %v1200
        %v1205 = vsel %vm1203, %v1183, %v1201
        %v1206 = vsel %vm895, %v1204, 0.0
        %1207 = vadd.xlane.f32.xlu0 %v1206
        %v1208 = vpop.xlane.xlu0 %1207
        %v1209 = vsel %vm895, %v1205, 0.0
        %1210 = vadd.xlane.f32.xlu0 %v1209
        %v1211 = vpop.xlane.xlu0 %1210
        %v1212 = vmul.f32 %v1208, %v902
        %v1213 = vmul.f32 %v1211, %v902
        %v1214 = vld [vmem:[%s11] sm:$0xff]
        %v1215 = vld [vmem:[%s11 + $0x8] sm:$0xff]
        %v1216 = vmul.f32 %v1214, %v1212
        %v1217 = vmul.f32 %v1215, %v1213
        %v1218 = vsel %vm909, %v1216, 0.0
        %v1219 = vsel %vm909, %v1217, 0.0
        %v1220 = vadd.f32 %v1218, %v1219
        %v1221 = vrot.slane %v1220, 4
        %v1222 = vadd.f32 %v1220, %v1221
        %v1223 = vrot.slane %v1222, 2
        %v1224 = vadd.f32 %v1222, %v1223
        %v1225 = vrot.slane %v1224, 1
        %v1226 = vadd.f32 %v1224, %v1225
        %v1227 = vld [vmem:[%s12] sm:$0x1]
        %v1228 = vadd.f32 %v1226, %v1227
        %v1229 = vmin.f32 %v1228, 20.0
        %v1230 = vmul.f32 %v1229, 1.442695
        %v1231 = vpow.pop %v1230
        %v1232 = vadd.f32 %v1231, 2.0
        %v1233 = vmul.f32 %v1231, %v1232
        %v1234 = vmul.f32 %v1228, %v1233
        %v1235 = vadd.f32 %v1233, 2.0
        %v1236 = vrcp.pop %v1235
        %v1237 = vmul.f32 %v1234, %v1236
        %vm1238 = vcmp.gt.f32.partialorder %v1228, 20.0
        %v1239 = vsel %vm1238, %v1228, %v1237
        %v1240 = vld [vmem:[%s13] sm:$0xff]
        %v1241 = vld [vmem:[%s13 + $0x8] sm:$0xff]
        %v1242 = vlaneseq
        %v1243 = vshrl.u32 %v1242, 7
        %v1244 = vsub.s32 0, %v1243
        %v1245 = vrot.slane %v1239, %v1244
        %v1246 = vmul.f32 %v1240, %v1245
        %v1247 = vmul.f32 %v1241, %v1245
        %v1248 = vsel %vm909, %v1246, 0.0
        %1249 = vadd.xlane.f32.xlu0 %v1248
        %v1250 = vpop.xlane.xlu0 %1249
        %v1251 = vsel %vm909, %v1247, 0.0
        %1252 = vadd.xlane.f32.xlu0 %v1251
        %v1253 = vpop.xlane.xlu0 %1252
        %v1254 = vadd.f32 %v1250, %v1060
        %v1255 = vadd.f32 %v1253, %v1061
        %v1256 = vand.u32 2147483647, %v1254
        %v1257 = vand.u32 2147483647, %v1255
        %v1258 = vsub.f32 0.0, %v1256
        %v1259 = vsub.f32 0.0, %v1257
        %v1260 = vmul.f32 %v1258, 1.442695
        %v1261 = vpow.pop %v1260
        %v1262 = vmul.f32 %v1259, 1.442695
        %v1263 = vpow.pop %v1262
        %v1264 = vadd.f32 %v1261, 1.0
        %v1265 = vadd.f32 %v1263, 1.0
        %v1266 = vrcp.pop %v1264
        %v1267 = vrcp.pop %v1265
        %vm1268 = vcmp.ge.f32.partialorder %v1254, 0.0
        %vm1269 = vcmp.ge.f32.partialorder %v1255, 0.0
        %v1270 = vmul.f32 %v1261, %v1266
        %v1271 = vmul.f32 %v1263, %v1267
        %v1272 = vsel %vm1268, %v1266, %v1270
        %v1273 = vsel %vm1269, %v1267, %v1271
        %1275 = vset.pattern.permute.xlu0 1
        %1276 = vperm.xlu0 %1275, %v1272
        %v1277 = vpop.permute.xlu0 %1276
        %1280 = vset.pattern.permute.xlu0 1
        %1281 = vperm.xlu0 %1280, %v1273
        %v1282 = vpop.permute.xlu0 %1281
        %v1284 = vmul.f32 %v1204, %v1277
        %v1285 = vmul.f32 %v1205, %v1282
        %v1286 = vld [vmem:[%s14] sm:$0xf]
        %v1287 = vld [vmem:[%s14 + $0x4] sm:$0xf]
        %v1288 = vpack.c.bf16 %v1285, %v1284
        %1289 = vset.pattern.permute.xlu0 2
        %1290 = vperm.xlu0 %1289, %v1060
        %v1291 = vpop.permute.xlu0 %1290
        %1293 = vset.pattern.permute.xlu0 2
        %1294 = vperm.xlu0 %1293, %v1061
        %v1295 = vpop.permute.xlu0 %1294
        %v1299 = vunpack.c.l.b16 %v1286
        %v1300 = vunpack.c.l.b16 %v1287
        %v1301 = vpack.c.b16 %v1300, %v1299
        %v1303 = vsel %vm895, %v1301, 0
        %1305 = vmatprep.subr.bf16.mxu0 0
        %1306 = vmatpush1.bf16.msra.mxu0 %v1288
        %1307 = vmatprep.subr.bf16.mxu0 0
        %1308 = vmatpush1.bf16.msra.mxu0 0
        %1309 = vmatprep.subr.bf16.mxu0 0
        %1310 = vmatpush1.bf16.msra.mxu0 0
        %1311 = vmatprep.subr.bf16.mxu0 0
        %1312 = vmatpush1.bf16.msra.mxu0 0
        %1313 = vmatprep.subr.bf16.mxu0 0
        %1314 = vmatpush1.bf16.msra.mxu0 0
        %1315 = vmatprep.subr.bf16.mxu0 0
        %1316 = vmatpush1.bf16.msra.mxu0 0
        %1317 = vmatprep.subr.bf16.mxu0 0
        %1318 = vmatpush1.bf16.msra.mxu0 0
        %1319 = vmatprep.subr.bf16.mxu0 0
        %1320 = vmatpush1.bf16.msra.mxu0 0
        %1321 = vmatprep.subr.bf16.mxu0 0
        %1322 = vmatpush1.bf16.msra.mxu0 0
        %1323 = vmatprep.subr.bf16.mxu0 0
        %1324 = vmatpush1.bf16.msra.mxu0 0
        %1325 = vmatprep.subr.bf16.mxu0 0
        %1326 = vmatpush1.bf16.msra.mxu0 0
        %1327 = vmatprep.subr.bf16.mxu0 0
        %1328 = vmatpush1.bf16.msra.mxu0 0
        %1329 = vmatprep.subr.bf16.mxu0 0
        %1330 = vmatpush1.bf16.msra.mxu0 0
        %1331 = vmatprep.subr.bf16.mxu0 0
        %1332 = vmatpush1.bf16.msra.mxu0 0
        %1333 = vmatprep.subr.bf16.mxu0 0
        %1334 = vmatpush1.bf16.msra.mxu0 0
        %1335 = vmatprep.subr.bf16.mxu0 0
        %1336 = vmatpush1.bf16.msra.mxu0 0
        %1337 = vmatprep.mubr.bf16.mxu0 0
        %1338 = vmatmul.mubr.bf16.gmra.mrb[0].mxu0 %v1303
        %v1339 = vpop.f32.mrb[0].mxu0
        %v1340 = vadd.f32 %v1291, %v1339
        %v1341 = vpop.f32.mrb[0].mxu0
        %v1342 = vpop.f32.mrb[0].mxu0
        %v1343 = vadd.f32 %v1295, %v1342
        %v1344 = vpop.f32.mrb[0].mxu0
        %1345 = vdwg.mxu0
        %v1346 = vmin.f32 %v1340, 20.0
        %v1347 = vmin.f32 %v1343, 20.0
        %v1348 = vmul.f32 %v1346, 1.442695
        %v1349 = vpow.pop %v1348
        %v1350 = vmul.f32 %v1347, 1.442695
        %v1351 = vpow.pop %v1350
        %v1352 = vadd.f32 %v1349, 2.0
        %v1353 = vadd.f32 %v1351, 2.0
        %v1354 = vmul.f32 %v1349, %v1352
        %v1355 = vmul.f32 %v1351, %v1353
        %v1356 = vmul.f32 %v1340, %v1354
        %v1357 = vmul.f32 %v1343, %v1355
        %v1358 = vadd.f32 %v1354, 2.0
        %v1359 = vadd.f32 %v1355, 2.0
        %v1360 = vrcp.pop %v1358
        %v1361 = vrcp.pop %v1359
        %v1362 = vmul.f32 %v1356, %v1360
        %v1363 = vmul.f32 %v1357, %v1361
        %vm1364 = vcmp.gt.f32.partialorder %v1340, 20.0
        %vm1365 = vcmp.gt.f32.partialorder %v1343, 20.0
        %v1366 = vsel %vm1364, %v1340, %v1362
        %v1367 = vsel %vm1365, %v1343, %v1363
        %s1368 = sld [smem:[#allocation3]]
        %v1369 = vstv %s1368
        %v1370 = vmul.f32 %v1369, %v1366
        %v1371 = vmul.f32 %v1369, %v1367
        %v1372 = vadd.f32 %v1058, %v1370
        %v1373 = vadd.f32 %v1059, %v1371
        %v1374 = vld [vmem:[%s17] sm:$0xf]
        %v1375 = vpack.c.bf16 %v1373, %v1372
        %v1376 = vld [vmem:[%s18] sm:$0xff]
        %1378 = vset.pattern.permute.xlu0 0
        %1379 = vperm.xlu0 %1378, %v1376
        %v1380 = vpop.permute.xlu0 %1379
        %v1383 = vsel %vm895, %v1374, 0
        %1385 = vmatprep.subr.bf16.mxu0 0
        %1386 = vmatpush1.bf16.msra.mxu0 %v1375
        %1387 = vmatprep.subr.bf16.mxu0 0
        %1388 = vmatpush1.bf16.msra.mxu0 0
        %1389 = vmatprep.subr.bf16.mxu0 0
        %1390 = vmatpush1.bf16.msra.mxu0 0
        %1391 = vmatprep.subr.bf16.mxu0 0
        %1392 = vmatpush1.bf16.msra.mxu0 0
        %1393 = vmatprep.subr.bf16.mxu0 0
        %1394 = vmatpush1.bf16.msra.mxu0 0
        %1395 = vmatprep.subr.bf16.mxu0 0
        %1396 = vmatpush1.bf16.msra.mxu0 0
        %1397 = vmatprep.subr.bf16.mxu0 0
        %1398 = vmatpush1.bf16.msra.mxu0 0
        %1399 = vmatprep.subr.bf16.mxu0 0
        %1400 = vmatpush1.bf16.msra.mxu0 0
        %1401 = vmatprep.subr.bf16.mxu0 0
        %1402 = vmatpush1.bf16.msra.mxu0 0
        %1403 = vmatprep.subr.bf16.mxu0 0
        %1404 = vmatpush1.bf16.msra.mxu0 0
        %1405 = vmatprep.subr.bf16.mxu0 0
        %1406 = vmatpush1.bf16.msra.mxu0 0
        %1407 = vmatprep.subr.bf16.mxu0 0
        %1408 = vmatpush1.bf16.msra.mxu0 0
        %1409 = vmatprep.subr.bf16.mxu0 0
        %1410 = vmatpush1.bf16.msra.mxu0 0
        %1411 = vmatprep.subr.bf16.mxu0 0
        %1412 = vmatpush1.bf16.msra.mxu0 0
        %1413 = vmatprep.subr.bf16.mxu0 0
        %1414 = vmatpush1.bf16.msra.mxu0 0
        %1415 = vmatprep.subr.bf16.mxu0 0
        %1416 = vmatpush1.bf16.msra.mxu0 0
        %1417 = vmatprep.mubr.bf16.mxu0 0
        %1418 = vmatmul.mubr.bf16.gmra.mrb[0].mxu0 %v1383
        %v1419 = vpop.f32.mrb[0].mxu0
        %v1420 = vadd.f32 %v1380, %v1419
        %v1421 = vpop.f32.mrb[0].mxu0
        %v1422 = vpop.f32.mrb[0].mxu0
        %v1423 = vpop.f32.mrb[0].mxu0
        %1424 = vdwg.mxu0
        %v1425 = vsel %vm895, %v1420, -inf
        %v1426 = vrot.slane %v1425, 4
        %v1427 = vmax.f32 %v1425, %v1426
        %v1428 = vrot.slane %v1427, 2
        %v1429 = vmax.f32 %v1427, %v1428
        %v1430 = vrot.slane %v1429, 1
        %v1431 = vmax.f32 %v1429, %v1430
        %v1432 = vsub.f32 %v1420, %v1431
        %v1433 = vmul.f32 %v1432, 1.442695
        %v1434 = vpow.pop %v1433
        %v1435 = vsel %vm895, %v1434, 0.0
        %v1436 = vrot.slane %v1435, 4
        %v1437 = vadd.f32 %v1435, %v1436
        %v1438 = vrot.slane %v1437, 2
        %v1439 = vadd.f32 %v1437, %v1438
        %v1440 = vrot.slane %v1439, 1
        %v1441 = vadd.f32 %v1439, %v1440
        %v1442 = vlog2.pop %v1441
        %v1443 = vmul.f32 %v1442, 0.6931472
        %v1444 = vsub.f32 %v1432, %v1443
        %1445 = vst.msk [vmem:[%s592] sm:$0xff] %vm895, %v1444
        %s1446 = sand.u32 %s446, 1
        %s1447 = scalar_lea.sflag [#allocation5], %s1446
        %s1448 = sand.u32 %s446, 1
        %s1449 = smul.addr %s1448, 8
        %s1450 = scalar_lea.vmem [#allocation4], %s1449
        // Predicated region
        $region97: #{tpu_custom_call.1} parent=95 // pred_check
          %p1451 = pneg %p456
        $region98: #{tpu_custom_call.1} parent=95 // pred_check_branch
          %1453 = sbr.rel (%p1451) target = $region100
        $region99: #{tpu_custom_call.1} parent=95 // pred_region
          %s1455 = ssub.s32 128, 128
          %1456 = vsyncadd %s1447, %s1455
          %s1457 = smul.addr %s34, 128
          %s1458 = scalar_lea.hbm %s19, %s1457
          %s1460 = sshll.u32 %s1450, 4
          %s1461 = int_to_ptr.vmem [resolvable:$true] %s1460
          %1463 = dma.vmem_to_hbm [thread:$0]  %s1461, 128, %s1458, %s1447
        $region100: #{tpu_custom_call.1} parent=95 // pred_fallthru
          _
      $region96: #{tpu_custom_call.1} parent=5 // pred_fallthru
        _
      %p1464 = scmp.le.s32.totalorder 2, %s29
      // Predicated region
      $region101: #{tpu_custom_call.1} parent=5 // pred_check
        %p1465 = pneg %p1464
      $region102: #{tpu_custom_call.1} parent=5 // pred_check_branch
        %1467 = sbr.rel (%p1465) target = $region104
      $region103: #{tpu_custom_call.1} parent=5 // pred_region
        %s1468 = ssub.s32 %s29, 2
        // Predicated region
        $region105: #{tpu_custom_call.1} parent=103 // pred_check
          %p1469 = pneg %p462
        $region106: #{tpu_custom_call.1} parent=103 // pred_check_branch
          %1471 = sbr.rel (%p1469) target = $region108
        $region107: #{tpu_custom_call.1} parent=103 // pred_region
          %s1472 = sand.u32 %s447, 1
          %s1473 = scalar_lea.sflag [#allocation5], %s1472
          %s1474 = sand.u32 %s447, 1
          %s1475 = smul.addr %s1474, 8
          %s1476 = scalar_lea.vmem [#allocation4], %s1475
          %1477 = dma.done %s1473, 128
        $region108: #{tpu_custom_call.1} parent=103 // pred_fallthru
          _
      $region104: #{tpu_custom_call.1} parent=5 // pred_fallthru
        _
    $region6: #{tpu_custom_call.1} parent=1 // loop_footer
      %s33 = sadd.s32 1, %s29
    $region7: #{tpu_custom_call.1} parent=1 // loop_footer_branch
      %28 = sbr.rel target = $region3
    $region8: #{tpu_custom_call.1} parent=1 // loop_exit
      _
    %1478 = vsyncpa [#allocation5], 1
    %s1479 = scalar_lea.sflag [#allocation5], 1
    %1480 = vsyncpa %s1479, 1

</llo_original>
